<compile_context>
chip_gen: v5e
topology: v5e:2x2
jax: 0.10.0
libtpu: 0.0.40
codegen_flags: <defaults>
</compile_context>

<pallas_src>
import math
import functools

import jax
import jax.numpy as jnp
from jax.experimental import pallas as pl
from jax.experimental.pallas import tpu as pltpu


# ----------------------------- shared math --------------------------------
def _layernorm(x, w, b, eps=1e-5):
    mu = jnp.mean(x, axis=-1, keepdims=True)
    var = jnp.mean(jnp.square(x - mu), axis=-1, keepdims=True)
    return (x - mu) * jax.lax.rsqrt(var + eps) * w + b


def _gelu_exact(x):
    # matches torch.nn.GELU() (erf formulation)
    return 0.5 * x * (1.0 + jax.lax.erf(x * (1.0 / math.sqrt(2.0))))


# --------------------------- fused TomViT kernel ----------------------------
def _tomvit_kernel(patches_ref, clspos_ref, projw_ref, projb_ref,
                   ln1w_ref, ln1b_ref, wqkv_ref, wproj_ref, bproj_ref,
                   ln2w_ref, ln2b_ref, w1_ref, b1_ref, w2_ref, b2_ref,
                   lnfw_ref, lnfb_ref, headw_ref, headb_ref,
                   out_ref, act_ref, *, num_heads, num_layers):
    layer = pl.program_id(1)
    N, C = act_ref.shape
    hd = C // num_heads
    scale = hd ** -0.5
    bf16 = jnp.bfloat16

    # ---- depth 0: fused patch-embed + cls token + positional embedding ----
    @pl.when(layer == 0)
    def _embed():
        emb = jnp.dot(patches_ref[0], projw_ref[...],
                      preferred_element_type=jnp.float32) + projb_ref[...]
        row = jax.lax.broadcasted_iota(jnp.int32, (N, C), 0)
        # row 0 of `patches` is a zero pad (cls slot); clspos row 0 = cls + pos0
        act_ref[...] = jnp.where(row == 0, clspos_ref[0], emb + clspos_ref[0])

    x = act_ref[...]                                     # (N, C) f32 residual

    # ------------------------------ MSA branch ------------------------------
    h = _layernorm(x, ln1w_ref[0], ln1b_ref[0]).astype(bf16)
    qkv = jnp.dot(h, wqkv_ref[0], preferred_element_type=jnp.float32)  # (N,3C)
    # TODO(synk): for large head counts, switch this Python loop to
    # lax.fori_loop(..., unroll=True) over a stacked head axis.
    ctx_parts = []
    for i in range(num_heads):
        q = qkv[:, i * hd:(i + 1) * hd].astype(bf16)
        k = qkv[:, C + i * hd:C + (i + 1) * hd].astype(bf16)
        v = qkv[:, 2 * C + i * hd:2 * C + (i + 1) * hd].astype(bf16)
        s = jnp.einsum('nd,md->nm', q, k,
                       preferred_element_type=jnp.float32) * scale    # (N, N)
        s = s - jnp.max(s, axis=-1, keepdims=True)
        p = jnp.exp(s)
        p = p * pl.reciprocal(jnp.sum(p, axis=-1, keepdims=True), approx=True)
        ctx_parts.append(jnp.dot(p.astype(bf16), v,
                                 preferred_element_type=jnp.float32))  # (N,hd)
    ctx = jnp.concatenate(ctx_parts, axis=-1).astype(bf16)             # (N, C)
    attn_out = jnp.dot(ctx, wproj_ref[0],
                       preferred_element_type=jnp.float32) + bproj_ref[0]
    x = x + attn_out

    # ------------------------------ MLP branch ------------------------------
    h = _layernorm(x, ln2w_ref[0], ln2b_ref[0])
    h = jnp.dot(h.astype(bf16), w1_ref[0],
                preferred_element_type=jnp.float32) + b1_ref[0]
    h = _gelu_exact(h)
    h = jnp.dot(h.astype(bf16), w2_ref[0],
                preferred_element_type=jnp.float32) + b2_ref[0]
    x = x + h

    act_ref[...] = x

    # ---- last depth step: final LayerNorm + head on the cls row only ------
    @pl.when(layer == num_layers - 1)
    def _head():
        cls = x[0:1, :]                                   # (1, C)
        hc = _layernorm(cls, lnfw_ref[...], lnfb_ref[...]).astype(bf16)
        out_ref[0] = (jnp.dot(hc, headw_ref[...],
                              preferred_element_type=jnp.float32)
                      + headb_ref[...])


# ------------------------------- glue --------------------------------------
def img_to_patches(x, p):
    # NCHW -> (B, num_patches, C*p*p), flatten order (C, ph, pw) to match Conv2d
    B, C, H, W = x.shape
    x = x.reshape(B, C, H // p, p, W // p, p)
    x = x.transpose(0, 2, 4, 1, 3, 5)
    return x.reshape(B, (H // p) * (W // p), C * p * p)


def tomvit_forward(params, x, *, patch, num_heads):
    bf16 = jnp.bfloat16
    B = x.shape[0]

    patches = img_to_patches(x, patch)                       # (B, P, Cp)
    # prepend a zero "patch" row so the token axis already holds the cls slot
    patches = jnp.pad(patches, ((0, 0), (1, 0), (0, 0))).astype(bf16)
    _, N, Cp = patches.shape

    C = params['proj_w'].shape[1]
    # cls token + learned positional embedding, pre-folded into one (1, N, C)
    clspos = jnp.concatenate(
        [params['cls_token'] + params['pos_embed'][:, :1],
         params['pos_embed'][:, 1:]], axis=1)

    blocks = params['blocks']
    L = len(blocks)

    def stack_mat(key_, dtype):
        return jnp.stack([blk[key_] for blk in blocks]).astype(dtype)

    def stack_vec(key_):
        return jnp.stack([blk[key_] for blk in blocks])[:, None, :]  # (L,1,dim)

    wqkv = stack_mat('wqkv', bf16)       # (L, C, 3C)
    wproj = stack_mat('wproj', bf16)     # (L, C, C)
    w1 = stack_mat('w1', bf16)           # (L, C, H1)
    w2 = stack_mat('w2', bf16)           # (L, H1, C)
    ln1_w, ln1_b = stack_vec('ln1_w'), stack_vec('ln1_b')
    ln2_w, ln2_b = stack_vec('ln2_w'), stack_vec('ln2_b')
    bproj, b1, b2 = stack_vec('bproj'), stack_vec('b1'), stack_vec('b2')

    H1 = w1.shape[2]
    NC = params['head_w'].shape[1]

    kernel = functools.partial(_tomvit_kernel, num_heads=num_heads,
                               num_layers=L)

    def fixed(shape):
        if len(shape) == 2:
            return pl.BlockSpec(shape, lambda b, l: (0, 0))
        return pl.BlockSpec(shape, lambda b, l: (0, 0, 0))

    def per_layer(shape):                 # stacked on a leading depth axis
        return pl.BlockSpec((1,) + tuple(shape[1:]), lambda b, l: (l, 0, 0))

    out = pl.pallas_call(
        kernel,
        out_shape=jax.ShapeDtypeStruct((B, 1, NC), jnp.float32),
        grid=(B, L),
        in_specs=[
            pl.BlockSpec((1, N, Cp), lambda b, l: (b, 0, 0)),   # patches
            fixed((1, N, C)),                                   # cls + pos
            fixed((Cp, C)), fixed((1, C)),                      # proj_w, proj_b
            per_layer((L, 1, C)), per_layer((L, 1, C)),         # ln1 w, b
            per_layer((L, C, 3 * C)),                           # wqkv
            per_layer((L, C, C)), per_layer((L, 1, C)),         # wproj, bproj
            per_layer((L, 1, C)), per_layer((L, 1, C)),         # ln2 w, b
            per_layer((L, C, H1)), per_layer((L, 1, H1)),       # w1, b1
            per_layer((L, H1, C)), per_layer((L, 1, C)),        # w2, b2
            fixed((1, C)), fixed((1, C)),                       # final LN w, b
            fixed((C, NC)), fixed((1, NC)),                     # head w, b
        ],
        out_specs=pl.BlockSpec((1, 1, NC), lambda b, l: (b, 0, 0)),
        scratch_shapes=[pltpu.VMEM((N, C), jnp.float32)],       # residual stream
        compiler_params=pltpu.CompilerParams(
            dimension_semantics=("parallel", "arbitrary")),
    )(patches, clspos,
      params['proj_w'].astype(bf16), params['proj_b'],
      ln1_w, ln1_b, wqkv, wproj, bproj, ln2_w, ln2_b, w1, b1, w2, b2,
      params['ln_w'], params['ln_b'],
      params['head_w'].astype(bf16), params['head_b'])
    return out[:, 0, :]


# ----------------------- pure-JAX reference (checking) ---------------------
def _ref_msa(h, wqkv, wproj, bproj, num_heads):
    B, N, C = h.shape
    hd = C // num_heads
    qkv = h @ wqkv
    qkv = qkv.reshape(B, N, 3, num_heads, hd).transpose(2, 0, 3, 1, 4)
    q, k, v = qkv[0], qkv[1], qkv[2]
    attn = jnp.einsum('bhnd,bhmd->bhnm', q, k) * hd ** -0.5
    attn = jax.nn.softmax(attn, axis=-1)
    out = jnp.einsum('bhnm,bhmd->bhnd', attn, v)
    out = out.transpose(0, 2, 1, 3).reshape(B, N, C)
    return out @ wproj + bproj


def ref_forward(params, x, *, patch, num_heads):
    B = x.shape[0]
    patches = img_to_patches(x, patch)
    emb = patches @ params['proj_w'] + params['proj_b']
    D = emb.shape[-1]
    cls = jnp.broadcast_to(params['cls_token'], (B, 1, D))
    z = jnp.concatenate([cls, emb], axis=1) + params['pos_embed']
    for blk in params['blocks']:
        h = _layernorm(z, blk['ln1_w'], blk['ln1_b'])
        z = z + _ref_msa(h, blk['wqkv'], blk['wproj'], blk['bproj'], num_heads)
        h = _layernorm(z, blk['ln2_w'], blk['ln2_b'])
        h = jax.nn.gelu(h @ blk['w1'] + blk['b1'], approximate=False)
        z = z + (h @ blk['w2'] + blk['b2'])
    z = _layernorm(z, params['ln_w'], params['ln_b'])
    logits = z @ params['head_w'] + params['head_b']
    return logits[:, 0]


# --------------------------- parameter init --------------------------------
def init_params(key, *, in_chans, patch, embed_dim, depth, num_heads,
                mlp_ratio, num_classes, img_size):
    D = embed_dim
    Cp = in_chans * patch * patch
    hidden = int(D * mlp_ratio)
    num_tokens = (img_size // patch) ** 2 + 1   # + cls token
    keys = iter(jax.random.split(key, 8 + depth * 4))

    def nrm(shape, std=0.02):
        return std * jax.random.normal(next(keys), shape, jnp.float32)

    params = {
        'proj_w': nrm((Cp, D)),                        # Conv2d weight, flattened
        'proj_b': jnp.zeros((1, D), jnp.float32),
        'cls_token': nrm((1, 1, D), std=1e-6),
        'pos_embed': nrm((1, num_tokens, D)),          # has_basic_poe=True
        'ln_w': jnp.ones((1, D), jnp.float32),
        'ln_b': jnp.zeros((1, D), jnp.float32),
        'head_w': nrm((D, num_classes)),
        'head_b': jnp.zeros((1, num_classes), jnp.float32),
        'blocks': [],
    }
    for _ in range(depth):
        params['blocks'].append({
            'ln1_w': jnp.ones((D,), jnp.float32),
            'ln1_b': jnp.zeros((D,), jnp.float32),
            'wqkv': nrm((D, 3 * D)),                   # qkv_bias=False
            'wproj': nrm((D, D)),
            'bproj': jnp.zeros((D,), jnp.float32),
            'ln2_w': jnp.ones((D,), jnp.float32),
            'ln2_b': jnp.zeros((D,), jnp.float32),
            'w1': nrm((D, hidden)),
            'b1': jnp.zeros((hidden,), jnp.float32),
            'w2': nrm((hidden, D)),
            'b2': jnp.zeros((D,), jnp.float32),
        })
    return params


# --------------------------------- main -------------------------------------
if __name__ == "__main__":
    # small config consistent with TomViT(img_size, patch_size, ...)
    IMG, PATCH, INCH = 16, 4, 3
    D, DEPTH, HEADS, MLP_R, NCLS, B = 48, 3, 4, 2.0, 10, 2

    key = jax.random.PRNGKey(0)
    kparam, kx = jax.random.split(key)
    params = init_params(kparam, in_chans=INCH, patch=PATCH, embed_dim=D,
                         depth=DEPTH, num_heads=HEADS, mlp_ratio=MLP_R,
                         num_classes=NCLS, img_size=IMG)
    x = jax.random.normal(kx, (B, INCH, IMG, IMG), jnp.float32)  # NCHW

    out = tomvit_forward(params, x, patch=PATCH, num_heads=HEADS)
    out = jax.block_until_ready(out)

    ref = ref_forward(params, x, patch=PATCH, num_heads=HEADS)
    assert out.shape == (B, NCLS), out.shape
    assert bool(jnp.all(jnp.isfinite(out)))
    # kernel uses bf16 matmul operands (f32 accumulation) + approx reciprocal;
    # compare against the pure-f32 reference with a bf16-aware tolerance.
    assert bool(jnp.allclose(out, ref, atol=1e-2, rtol=2e-2)), (out, ref)
    print("KERNEL_OK")
</pallas_src>

<mosaic_0001>
module attributes {stable_mosaic.version = 11 : i64} {
  func.func @_tomvit_kernel(%arg0: i32, %arg1: i32, %arg2: memref<1x17x48xbf16, #tpu.memory_space<vmem>>, %arg3: memref<1x17x48xf32, #tpu.memory_space<vmem>>, %arg4: memref<48x48xbf16, #tpu.memory_space<vmem>>, %arg5: memref<1x48xf32, #tpu.memory_space<vmem>>, %arg6: memref<1x1x48xf32, #tpu.memory_space<vmem>>, %arg7: memref<1x1x48xf32, #tpu.memory_space<vmem>>, %arg8: memref<1x48x144xbf16, #tpu.memory_space<vmem>>, %arg9: memref<1x48x48xbf16, #tpu.memory_space<vmem>>, %arg10: memref<1x1x48xf32, #tpu.memory_space<vmem>>, %arg11: memref<1x1x48xf32, #tpu.memory_space<vmem>>, %arg12: memref<1x1x48xf32, #tpu.memory_space<vmem>>, %arg13: memref<1x48x96xbf16, #tpu.memory_space<vmem>>, %arg14: memref<1x1x96xf32, #tpu.memory_space<vmem>>, %arg15: memref<1x96x48xbf16, #tpu.memory_space<vmem>>, %arg16: memref<1x1x48xf32, #tpu.memory_space<vmem>>, %arg17: memref<1x48xf32, #tpu.memory_space<vmem>>, %arg18: memref<1x48xf32, #tpu.memory_space<vmem>>, %arg19: memref<48x10xbf16, #tpu.memory_space<vmem>>, %arg20: memref<1x10xf32, #tpu.memory_space<vmem>>, %arg21: memref<1x1x10xf32, #tpu.memory_space<vmem>>, %arg22: memref<17x48xf32, #tpu.memory_space<vmem>>) attributes {dimension_semantics = [#tpu.dimension_semantics<parallel>, #tpu.dimension_semantics<arbitrary>], iteration_bounds = array<i64: 2, 3>, scalar_prefetch = 0 : i64, scratch_operands = 1 : i64, tpu.core_type = #tpu.core_type<tc>, window_params = [{transform_indices = @transform_0, window_bounds = array<i64: 1, 17, 48>}, {pipeline_mode = #tpu.pipeline_mode<synchronous>, transform_indices = @transform_1, window_bounds = array<i64: 1, 17, 48>}, {pipeline_mode = #tpu.pipeline_mode<synchronous>, transform_indices = @transform_2, window_bounds = array<i64: 48, 48>}, {pipeline_mode = #tpu.pipeline_mode<synchronous>, transform_indices = @transform_3, window_bounds = array<i64: 1, 48>}, {transform_indices = @transform_4, window_bounds = array<i64: 1, 1, 48>}, {transform_indices = @transform_5, window_bounds = array<i64: 1, 1, 48>}, {transform_indices = @transform_6, window_bounds = array<i64: 1, 48, 144>}, {transform_indices = @transform_7, window_bounds = array<i64: 1, 48, 48>}, {transform_indices = @transform_8, window_bounds = array<i64: 1, 1, 48>}, {transform_indices = @transform_9, window_bounds = array<i64: 1, 1, 48>}, {transform_indices = @transform_10, window_bounds = array<i64: 1, 1, 48>}, {transform_indices = @transform_11, window_bounds = array<i64: 1, 48, 96>}, {transform_indices = @transform_12, window_bounds = array<i64: 1, 1, 96>}, {transform_indices = @transform_13, window_bounds = array<i64: 1, 96, 48>}, {transform_indices = @transform_14, window_bounds = array<i64: 1, 1, 48>}, {pipeline_mode = #tpu.pipeline_mode<synchronous>, transform_indices = @transform_15, window_bounds = array<i64: 1, 48>}, {pipeline_mode = #tpu.pipeline_mode<synchronous>, transform_indices = @transform_16, window_bounds = array<i64: 1, 48>}, {pipeline_mode = #tpu.pipeline_mode<synchronous>, transform_indices = @transform_17, window_bounds = array<i64: 48, 10>}, {pipeline_mode = #tpu.pipeline_mode<synchronous>, transform_indices = @transform_18, window_bounds = array<i64: 1, 10>}, {transform_indices = @transform_19, window_bounds = array<i64: 1, 1, 10>}]} {
    %c0_i32 = arith.constant 0 : i32
    %0 = arith.cmpi eq, %arg1, %c0_i32 : i32
    %1 = arith.extui %0 : i1 to i32
    %c0_i32_0 = arith.constant 0 : i32
    %2 = arith.cmpi ne, %1, %c0_i32_0 : i32
    scf.if %2 {
      %c0_74 = arith.constant 0 : index
      %c0_75 = arith.constant 0 : index
      %c0_76 = arith.constant 0 : index
      %183 = vector.load %arg2[%c0_74, %c0_75, %c0_76] : memref<1x17x48xbf16, #tpu.memory_space<vmem>>, vector<1x17x48xbf16>
      %184 = vector.shape_cast %183 : vector<1x17x48xbf16> to vector<17x48xbf16>
      %c0_77 = arith.constant 0 : index
      %c0_78 = arith.constant 0 : index
      %185 = vector.load %arg4[%c0_77, %c0_78] : memref<48x48xbf16, #tpu.memory_space<vmem>>, vector<48x48xbf16>
      %cst_79 = arith.constant dense<0.000000e+00> : vector<17x48xf32>
      %186 = tpu.matmul %184, %185, %cst_79 {dimension_numbers = #tpu.dot_dimension_numbers<[1], [0], [0], [1], [0, 0, 1, 1], [], []>} : vector<17x48xbf16>, vector<48x48xbf16>, vector<17x48xf32> -> vector<17x48xf32>
      %c0_80 = arith.constant 0 : index
      %c0_81 = arith.constant 0 : index
      %187 = vector.load %arg5[%c0_80, %c0_81] : memref<1x48xf32, #tpu.memory_space<vmem>>, vector<1x48xf32>
      %188 = vector.broadcast %187 : vector<1x48xf32> to vector<17x48xf32>
      %189 = arith.addf %186, %188 : vector<17x48xf32>
      %190 = tpu.iota {dimensions = array<i32: 0>} : vector<17x48xi32>
      %c0_i32_82 = arith.constant 0 : i32
      %191 = vector.broadcast %c0_i32_82 : i32 to vector<17x48xi32>
      %192 = arith.cmpi eq, %190, %191 : vector<17x48xi32>
      %c0_83 = arith.constant 0 : index
      %c0_84 = arith.constant 0 : index
      %c0_85 = arith.constant 0 : index
      %193 = vector.load %arg3[%c0_83, %c0_84, %c0_85] : memref<1x17x48xf32, #tpu.memory_space<vmem>>, vector<1x17x48xf32>
      %194 = vector.shape_cast %193 : vector<1x17x48xf32> to vector<17x48xf32>
      %c0_86 = arith.constant 0 : index
      %c0_87 = arith.constant 0 : index
      %c0_88 = arith.constant 0 : index
      %195 = vector.load %arg3[%c0_86, %c0_87, %c0_88] : memref<1x17x48xf32, #tpu.memory_space<vmem>>, vector<1x17x48xf32>
      %196 = vector.shape_cast %195 : vector<1x17x48xf32> to vector<17x48xf32>
      %197 = arith.addf %189, %196 : vector<17x48xf32>
      %198 = arith.select %192, %194, %197 : vector<17x48xi1>, vector<17x48xf32>
      %c0_89 = arith.constant 0 : index
      %c0_90 = arith.constant 0 : index
      %199 = vector.load %arg22[%c0_89, %c0_90] : memref<17x48xf32, #tpu.memory_space<vmem>>, vector<17x48xf32>
      tpu.vector_store %arg22[%c0_89, %c0_90], %198 {strides = array<i32>} : memref<17x48xf32, #tpu.memory_space<vmem>>, vector<17x48xf32>,
    } else {
    }
    %c0 = arith.constant 0 : index
    %c0_1 = arith.constant 0 : index
    %3 = vector.load %arg22[%c0, %c0_1] : memref<17x48xf32, #tpu.memory_space<vmem>>, vector<17x48xf32>
    %c0_2 = arith.constant 0 : index
    %c0_3 = arith.constant 0 : index
    %c0_4 = arith.constant 0 : index
    %4 = vector.load %arg6[%c0_2, %c0_3, %c0_4] : memref<1x1x48xf32, #tpu.memory_space<vmem>>, vector<1x1x48xf32>
    %5 = vector.shape_cast %4 : vector<1x1x48xf32> to vector<1x48xf32>
    %c0_5 = arith.constant 0 : index
    %c0_6 = arith.constant 0 : index
    %c0_7 = arith.constant 0 : index
    %6 = vector.load %arg7[%c0_5, %c0_6, %c0_7] : memref<1x1x48xf32, #tpu.memory_space<vmem>>, vector<1x1x48xf32>
    %7 = vector.shape_cast %6 : vector<1x1x48xf32> to vector<1x48xf32>
    %cst = arith.constant dense<0.000000e+00> : vector<17xf32>
    %8 = vector.multi_reduction <add>, %3, %cst [1] : vector<17x48xf32> to vector<17xf32>
    %9 = vector.shape_cast %8 : vector<17xf32> to vector<17x1xf32>
    %cst_8 = arith.constant 4.800000e+01 : f32
    %10 = vector.broadcast %cst_8 : f32 to vector<17x1xf32>
    %11 = arith.divf %9, %10 : vector<17x1xf32>
    %12 = vector.broadcast %11 : vector<17x1xf32> to vector<17x48xf32>
    %13 = arith.subf %3, %12 : vector<17x48xf32>
    %14 = arith.mulf %13, %13 : vector<17x48xf32>
    %cst_9 = arith.constant dense<0.000000e+00> : vector<17xf32>
    %15 = vector.multi_reduction <add>, %14, %cst_9 [1] : vector<17x48xf32> to vector<17xf32>
    %16 = vector.shape_cast %15 : vector<17xf32> to vector<17x1xf32>
    %cst_10 = arith.constant 4.800000e+01 : f32
    %17 = vector.broadcast %cst_10 : f32 to vector<17x1xf32>
    %18 = arith.divf %16, %17 : vector<17x1xf32>
    %19 = vector.broadcast %11 : vector<17x1xf32> to vector<17x48xf32>
    %20 = arith.subf %3, %19 : vector<17x48xf32>
    %cst_11 = arith.constant 9.99999974E-6 : f32
    %21 = vector.broadcast %cst_11 : f32 to vector<17x1xf32>
    %22 = arith.addf %18, %21 : vector<17x1xf32>
    %23 = math.rsqrt %22 : vector<17x1xf32>
    %24 = vector.broadcast %23 : vector<17x1xf32> to vector<17x48xf32>
    %25 = arith.mulf %20, %24 : vector<17x48xf32>
    %26 = vector.broadcast %5 : vector<1x48xf32> to vector<17x48xf32>
    %27 = arith.mulf %25, %26 : vector<17x48xf32>
    %28 = vector.broadcast %7 : vector<1x48xf32> to vector<17x48xf32>
    %29 = arith.addf %27, %28 : vector<17x48xf32>
    %30 = arith.truncf %29 : vector<17x48xf32> to vector<17x48xbf16>
    %c0_12 = arith.constant 0 : index
    %c0_13 = arith.constant 0 : index
    %c0_14 = arith.constant 0 : index
    %31 = vector.load %arg8[%c0_12, %c0_13, %c0_14] : memref<1x48x144xbf16, #tpu.memory_space<vmem>>, vector<1x48x144xbf16>
    %32 = vector.shape_cast %31 : vector<1x48x144xbf16> to vector<48x144xbf16>
    %cst_15 = arith.constant dense<0.000000e+00> : vector<17x144xf32>
    %33 = tpu.matmul %30, %32, %cst_15 {dimension_numbers = #tpu.dot_dimension_numbers<[1], [0], [0], [1], [0, 0, 1, 1], [], []>} : vector<17x48xbf16>, vector<48x144xbf16>, vector<17x144xf32> -> vector<17x144xf32>
    %34 = vector.extract_strided_slice %33 {offsets = [0, 0], sizes = [17, 12], strides = [1, 1]} : vector<17x144xf32> to vector<17x12xf32>
    %35 = arith.truncf %34 : vector<17x12xf32> to vector<17x12xbf16>
    %36 = vector.extract_strided_slice %33 {offsets = [0, 48], sizes = [17, 12], strides = [1, 1]} : vector<17x144xf32> to vector<17x12xf32>
    %37 = arith.truncf %36 : vector<17x12xf32> to vector<17x12xbf16>
    %38 = vector.extract_strided_slice %33 {offsets = [0, 96], sizes = [17, 12], strides = [1, 1]} : vector<17x144xf32> to vector<17x12xf32>
    %39 = arith.truncf %38 : vector<17x12xf32> to vector<17x12xbf16>
    "tpu.trace_start"() <{level = 10 : i32, message = "nd,md->nm"}> : () -> ()
    %cst_16 = arith.constant dense<0.000000e+00> : vector<17x17xf32>
    %40 = tpu.matmul %35, %37, %cst_16 {dimension_numbers = #tpu.dot_dimension_numbers<[1], [1], [0], [0], [0, 0, 1, 0], [], []>} : vector<17x12xbf16>, vector<17x12xbf16>, vector<17x17xf32> -> vector<17x17xf32>
    "tpu.trace_stop"() : () -> ()
    %cst_17 = arith.constant 0.288675129 : f32
    %41 = vector.broadcast %cst_17 : f32 to vector<17x17xf32>
    %42 = arith.mulf %40, %41 : vector<17x17xf32>
    %cst_18 = arith.constant dense<0xFF800000> : vector<17xf32>
    %43 = vector.multi_reduction <maximumf>, %42, %cst_18 [1] : vector<17x17xf32> to vector<17xf32>
    %44 = vector.shape_cast %43 : vector<17xf32> to vector<17x1xf32>
    %45 = vector.broadcast %44 : vector<17x1xf32> to vector<17x17xf32>
    %46 = arith.subf %42, %45 : vector<17x17xf32>
    %47 = math.exp %46 : vector<17x17xf32>
    %cst_19 = arith.constant dense<0.000000e+00> : vector<17xf32>
    %48 = vector.multi_reduction <add>, %47, %cst_19 [1] : vector<17x17xf32> to vector<17xf32>
    %49 = vector.shape_cast %48 : vector<17xf32> to vector<17x1xf32>
    %50 = tpu.reciprocal %49 {approx = true} : vector<17x1xf32> -> vector<17x1xf32>
    %51 = vector.broadcast %50 : vector<17x1xf32> to vector<17x17xf32>
    %52 = arith.mulf %47, %51 : vector<17x17xf32>
    %53 = arith.truncf %52 : vector<17x17xf32> to vector<17x17xbf16>
    %cst_20 = arith.constant dense<0.000000e+00> : vector<17x12xf32>
    %54 = tpu.matmul %53, %39, %cst_20 {dimension_numbers = #tpu.dot_dimension_numbers<[1], [0], [0], [1], [0, 0, 1, 1], [], []>} : vector<17x17xbf16>, vector<17x12xbf16>, vector<17x12xf32> -> vector<17x12xf32>
    %55 = vector.extract_strided_slice %33 {offsets = [0, 12], sizes = [17, 12], strides = [1, 1]} : vector<17x144xf32> to vector<17x12xf32>
    %56 = arith.truncf %55 : vector<17x12xf32> to vector<17x12xbf16>
    %57 = vector.extract_strided_slice %33 {offsets = [0, 60], sizes = [17, 12], strides = [1, 1]} : vector<17x144xf32> to vector<17x12xf32>
    %58 = arith.truncf %57 : vector<17x12xf32> to vector<17x12xbf16>
    %59 = vector.extract_strided_slice %33 {offsets = [0, 108], sizes = [17, 12], strides = [1, 1]} : vector<17x144xf32> to vector<17x12xf32>
    %60 = arith.truncf %59 : vector<17x12xf32> to vector<17x12xbf16>
    "tpu.trace_start"() <{level = 10 : i32, message = "nd,md->nm"}> : () -> ()
    %cst_21 = arith.constant dense<0.000000e+00> : vector<17x17xf32>
    %61 = tpu.matmul %56, %58, %cst_21 {dimension_numbers = #tpu.dot_dimension_numbers<[1], [1], [0], [0], [0, 0, 1, 0], [], []>} : vector<17x12xbf16>, vector<17x12xbf16>, vector<17x17xf32> -> vector<17x17xf32>
    "tpu.trace_stop"() : () -> ()
    %cst_22 = arith.constant 0.288675129 : f32
    %62 = vector.broadcast %cst_22 : f32 to vector<17x17xf32>
    %63 = arith.mulf %61, %62 : vector<17x17xf32>
    %cst_23 = arith.constant dense<0xFF800000> : vector<17xf32>
    %64 = vector.multi_reduction <maximumf>, %63, %cst_23 [1] : vector<17x17xf32> to vector<17xf32>
    %65 = vector.shape_cast %64 : vector<17xf32> to vector<17x1xf32>
    %66 = vector.broadcast %65 : vector<17x1xf32> to vector<17x17xf32>
    %67 = arith.subf %63, %66 : vector<17x17xf32>
    %68 = math.exp %67 : vector<17x17xf32>
    %cst_24 = arith.constant dense<0.000000e+00> : vector<17xf32>
    %69 = vector.multi_reduction <add>, %68, %cst_24 [1] : vector<17x17xf32> to vector<17xf32>
    %70 = vector.shape_cast %69 : vector<17xf32> to vector<17x1xf32>
    %71 = tpu.reciprocal %70 {approx = true} : vector<17x1xf32> -> vector<17x1xf32>
    %72 = vector.broadcast %71 : vector<17x1xf32> to vector<17x17xf32>
    %73 = arith.mulf %68, %72 : vector<17x17xf32>
    %74 = arith.truncf %73 : vector<17x17xf32> to vector<17x17xbf16>
    %cst_25 = arith.constant dense<0.000000e+00> : vector<17x12xf32>
    %75 = tpu.matmul %74, %60, %cst_25 {dimension_numbers = #tpu.dot_dimension_numbers<[1], [0], [0], [1], [0, 0, 1, 1], [], []>} : vector<17x17xbf16>, vector<17x12xbf16>, vector<17x12xf32> -> vector<17x12xf32>
    %76 = vector.extract_strided_slice %33 {offsets = [0, 24], sizes = [17, 12], strides = [1, 1]} : vector<17x144xf32> to vector<17x12xf32>
    %77 = arith.truncf %76 : vector<17x12xf32> to vector<17x12xbf16>
    %78 = vector.extract_strided_slice %33 {offsets = [0, 72], sizes = [17, 12], strides = [1, 1]} : vector<17x144xf32> to vector<17x12xf32>
    %79 = arith.truncf %78 : vector<17x12xf32> to vector<17x12xbf16>
    %80 = vector.extract_strided_slice %33 {offsets = [0, 120], sizes = [17, 12], strides = [1, 1]} : vector<17x144xf32> to vector<17x12xf32>
    %81 = arith.truncf %80 : vector<17x12xf32> to vector<17x12xbf16>
    "tpu.trace_start"() <{level = 10 : i32, message = "nd,md->nm"}> : () -> ()
    %cst_26 = arith.constant dense<0.000000e+00> : vector<17x17xf32>
    %82 = tpu.matmul %77, %79, %cst_26 {dimension_numbers = #tpu.dot_dimension_numbers<[1], [1], [0], [0], [0, 0, 1, 0], [], []>} : vector<17x12xbf16>, vector<17x12xbf16>, vector<17x17xf32> -> vector<17x17xf32>
    "tpu.trace_stop"() : () -> ()
    %cst_27 = arith.constant 0.288675129 : f32
    %83 = vector.broadcast %cst_27 : f32 to vector<17x17xf32>
    %84 = arith.mulf %82, %83 : vector<17x17xf32>
    %cst_28 = arith.constant dense<0xFF800000> : vector<17xf32>
    %85 = vector.multi_reduction <maximumf>, %84, %cst_28 [1] : vector<17x17xf32> to vector<17xf32>
    %86 = vector.shape_cast %85 : vector<17xf32> to vector<17x1xf32>
    %87 = vector.broadcast %86 : vector<17x1xf32> to vector<17x17xf32>
    %88 = arith.subf %84, %87 : vector<17x17xf32>
    %89 = math.exp %88 : vector<17x17xf32>
    %cst_29 = arith.constant dense<0.000000e+00> : vector<17xf32>
    %90 = vector.multi_reduction <add>, %89, %cst_29 [1] : vector<17x17xf32> to vector<17xf32>
    %91 = vector.shape_cast %90 : vector<17xf32> to vector<17x1xf32>
    %92 = tpu.reciprocal %91 {approx = true} : vector<17x1xf32> -> vector<17x1xf32>
    %93 = vector.broadcast %92 : vector<17x1xf32> to vector<17x17xf32>
    %94 = arith.mulf %89, %93 : vector<17x17xf32>
    %95 = arith.truncf %94 : vector<17x17xf32> to vector<17x17xbf16>
    %cst_30 = arith.constant dense<0.000000e+00> : vector<17x12xf32>
    %96 = tpu.matmul %95, %81, %cst_30 {dimension_numbers = #tpu.dot_dimension_numbers<[1], [0], [0], [1], [0, 0, 1, 1], [], []>} : vector<17x17xbf16>, vector<17x12xbf16>, vector<17x12xf32> -> vector<17x12xf32>
    %97 = vector.extract_strided_slice %33 {offsets = [0, 36], sizes = [17, 12], strides = [1, 1]} : vector<17x144xf32> to vector<17x12xf32>
    %98 = arith.truncf %97 : vector<17x12xf32> to vector<17x12xbf16>
    %99 = vector.extract_strided_slice %33 {offsets = [0, 84], sizes = [17, 12], strides = [1, 1]} : vector<17x144xf32> to vector<17x12xf32>
    %100 = arith.truncf %99 : vector<17x12xf32> to vector<17x12xbf16>
    %101 = vector.extract_strided_slice %33 {offsets = [0, 132], sizes = [17, 12], strides = [1, 1]} : vector<17x144xf32> to vector<17x12xf32>
    %102 = arith.truncf %101 : vector<17x12xf32> to vector<17x12xbf16>
    "tpu.trace_start"() <{level = 10 : i32, message = "nd,md->nm"}> : () -> ()
    %cst_31 = arith.constant dense<0.000000e+00> : vector<17x17xf32>
    %103 = tpu.matmul %98, %100, %cst_31 {dimension_numbers = #tpu.dot_dimension_numbers<[1], [1], [0], [0], [0, 0, 1, 0], [], []>} : vector<17x12xbf16>, vector<17x12xbf16>, vector<17x17xf32> -> vector<17x17xf32>
    "tpu.trace_stop"() : () -> ()
    %cst_32 = arith.constant 0.288675129 : f32
    %104 = vector.broadcast %cst_32 : f32 to vector<17x17xf32>
    %105 = arith.mulf %103, %104 : vector<17x17xf32>
    %cst_33 = arith.constant dense<0xFF800000> : vector<17xf32>
    %106 = vector.multi_reduction <maximumf>, %105, %cst_33 [1] : vector<17x17xf32> to vector<17xf32>
    %107 = vector.shape_cast %106 : vector<17xf32> to vector<17x1xf32>
    %108 = vector.broadcast %107 : vector<17x1xf32> to vector<17x17xf32>
    %109 = arith.subf %105, %108 : vector<17x17xf32>
    %110 = math.exp %109 : vector<17x17xf32>
    %cst_34 = arith.constant dense<0.000000e+00> : vector<17xf32>
    %111 = vector.multi_reduction <add>, %110, %cst_34 [1] : vector<17x17xf32> to vector<17xf32>
    %112 = vector.shape_cast %111 : vector<17xf32> to vector<17x1xf32>
    %113 = tpu.reciprocal %112 {approx = true} : vector<17x1xf32> -> vector<17x1xf32>
    %114 = vector.broadcast %113 : vector<17x1xf32> to vector<17x17xf32>
    %115 = arith.mulf %110, %114 : vector<17x17xf32>
    %116 = arith.truncf %115 : vector<17x17xf32> to vector<17x17xbf16>
    %cst_35 = arith.constant dense<0.000000e+00> : vector<17x12xf32>
    %117 = tpu.matmul %116, %102, %cst_35 {dimension_numbers = #tpu.dot_dimension_numbers<[1], [0], [0], [1], [0, 0, 1, 1], [], []>} : vector<17x17xbf16>, vector<17x12xbf16>, vector<17x12xf32> -> vector<17x12xf32>
    %118 = tpu.concatenate %54, %75, %96, %117 in 1 : vector<17x12xf32>, vector<17x12xf32>, vector<17x12xf32>, vector<17x12xf32> -> vector<17x48xf32>
    %119 = arith.truncf %118 : vector<17x48xf32> to vector<17x48xbf16>
    %c0_36 = arith.constant 0 : index
    %c0_37 = arith.constant 0 : index
    %c0_38 = arith.constant 0 : index
    %120 = vector.load %arg9[%c0_36, %c0_37, %c0_38] : memref<1x48x48xbf16, #tpu.memory_space<vmem>>, vector<1x48x48xbf16>
    %121 = vector.shape_cast %120 : vector<1x48x48xbf16> to vector<48x48xbf16>
    %cst_39 = arith.constant dense<0.000000e+00> : vector<17x48xf32>
    %122 = tpu.matmul %119, %121, %cst_39 {dimension_numbers = #tpu.dot_dimension_numbers<[1], [0], [0], [1], [0, 0, 1, 1], [], []>} : vector<17x48xbf16>, vector<48x48xbf16>, vector<17x48xf32> -> vector<17x48xf32>
    %c0_40 = arith.constant 0 : index
    %c0_41 = arith.constant 0 : index
    %c0_42 = arith.constant 0 : index
    %123 = vector.load %arg10[%c0_40, %c0_41, %c0_42] : memref<1x1x48xf32, #tpu.memory_space<vmem>>, vector<1x1x48xf32>
    %124 = vector.shape_cast %123 : vector<1x1x48xf32> to vector<1x48xf32>
    %125 = vector.broadcast %124 : vector<1x48xf32> to vector<17x48xf32>
    %126 = arith.addf %122, %125 : vector<17x48xf32>
    %127 = arith.addf %3, %126 : vector<17x48xf32>
    %c0_43 = arith.constant 0 : index
    %c0_44 = arith.constant 0 : index
    %c0_45 = arith.constant 0 : index
    %128 = vector.load %arg11[%c0_43, %c0_44, %c0_45] : memref<1x1x48xf32, #tpu.memory_space<vmem>>, vector<1x1x48xf32>
    %129 = vector.shape_cast %128 : vector<1x1x48xf32> to vector<1x48xf32>
    %c0_46 = arith.constant 0 : index
    %c0_47 = arith.constant 0 : index
    %c0_48 = arith.constant 0 : index
    %130 = vector.load %arg12[%c0_46, %c0_47, %c0_48] : memref<1x1x48xf32, #tpu.memory_space<vmem>>, vector<1x1x48xf32>
    %131 = vector.shape_cast %130 : vector<1x1x48xf32> to vector<1x48xf32>
    %cst_49 = arith.constant dense<0.000000e+00> : vector<17xf32>
    %132 = vector.multi_reduction <add>, %127, %cst_49 [1] : vector<17x48xf32> to vector<17xf32>
    %133 = vector.shape_cast %132 : vector<17xf32> to vector<17x1xf32>
    %cst_50 = arith.constant 4.800000e+01 : f32
    %134 = vector.broadcast %cst_50 : f32 to vector<17x1xf32>
    %135 = arith.divf %133, %134 : vector<17x1xf32>
    %136 = vector.broadcast %135 : vector<17x1xf32> to vector<17x48xf32>
    %137 = arith.subf %127, %136 : vector<17x48xf32>
    %138 = arith.mulf %137, %137 : vector<17x48xf32>
    %cst_51 = arith.constant dense<0.000000e+00> : vector<17xf32>
    %139 = vector.multi_reduction <add>, %138, %cst_51 [1] : vector<17x48xf32> to vector<17xf32>
    %140 = vector.shape_cast %139 : vector<17xf32> to vector<17x1xf32>
    %cst_52 = arith.constant 4.800000e+01 : f32
    %141 = vector.broadcast %cst_52 : f32 to vector<17x1xf32>
    %142 = arith.divf %140, %141 : vector<17x1xf32>
    %143 = vector.broadcast %135 : vector<17x1xf32> to vector<17x48xf32>
    %144 = arith.subf %127, %143 : vector<17x48xf32>
    %cst_53 = arith.constant 9.99999974E-6 : f32
    %145 = vector.broadcast %cst_53 : f32 to vector<17x1xf32>
    %146 = arith.addf %142, %145 : vector<17x1xf32>
    %147 = math.rsqrt %146 : vector<17x1xf32>
    %148 = vector.broadcast %147 : vector<17x1xf32> to vector<17x48xf32>
    %149 = arith.mulf %144, %148 : vector<17x48xf32>
    %150 = vector.broadcast %129 : vector<1x48xf32> to vector<17x48xf32>
    %151 = arith.mulf %149, %150 : vector<17x48xf32>
    %152 = vector.broadcast %131 : vector<1x48xf32> to vector<17x48xf32>
    %153 = arith.addf %151, %152 : vector<17x48xf32>
    %154 = arith.truncf %153 : vector<17x48xf32> to vector<17x48xbf16>
    %c0_54 = arith.constant 0 : index
    %c0_55 = arith.constant 0 : index
    %c0_56 = arith.constant 0 : index
    %155 = vector.load %arg13[%c0_54, %c0_55, %c0_56] : memref<1x48x96xbf16, #tpu.memory_space<vmem>>, vector<1x48x96xbf16>
    %156 = vector.shape_cast %155 : vector<1x48x96xbf16> to vector<48x96xbf16>
    %cst_57 = arith.constant dense<0.000000e+00> : vector<17x96xf32>
    %157 = tpu.matmul %154, %156, %cst_57 {dimension_numbers = #tpu.dot_dimension_numbers<[1], [0], [0], [1], [0, 0, 1, 1], [], []>} : vector<17x48xbf16>, vector<48x96xbf16>, vector<17x96xf32> -> vector<17x96xf32>
    %c0_58 = arith.constant 0 : index
    %c0_59 = arith.constant 0 : index
    %c0_60 = arith.constant 0 : index
    %158 = vector.load %arg14[%c0_58, %c0_59, %c0_60] : memref<1x1x96xf32, #tpu.memory_space<vmem>>, vector<1x1x96xf32>
    %159 = vector.shape_cast %158 : vector<1x1x96xf32> to vector<1x96xf32>
    %160 = vector.broadcast %159 : vector<1x96xf32> to vector<17x96xf32>
    %161 = arith.addf %157, %160 : vector<17x96xf32>
    %cst_61 = arith.constant 5.000000e-01 : f32
    %162 = vector.broadcast %cst_61 : f32 to vector<17x96xf32>
    %163 = arith.mulf %162, %161 : vector<17x96xf32>
    %cst_62 = arith.constant 0.707106769 : f32
    %164 = vector.broadcast %cst_62 : f32 to vector<17x96xf32>
    %165 = arith.mulf %161, %164 : vector<17x96xf32>
    %166 = math.erf %165 : vector<17x96xf32>
    %cst_63 = arith.constant 1.000000e+00 : f32
    %167 = vector.broadcast %cst_63 : f32 to vector<17x96xf32>
    %168 = arith.addf %167, %166 : vector<17x96xf32>
    %169 = arith.mulf %163, %168 : vector<17x96xf32>
    %170 = arith.truncf %169 : vector<17x96xf32> to vector<17x96xbf16>
    %c0_64 = arith.constant 0 : index
    %c0_65 = arith.constant 0 : index
    %c0_66 = arith.constant 0 : index
    %171 = vector.load %arg15[%c0_64, %c0_65, %c0_66] : memref<1x96x48xbf16, #tpu.memory_space<vmem>>, vector<1x96x48xbf16>
    %172 = vector.shape_cast %171 : vector<1x96x48xbf16> to vector<96x48xbf16>
    %cst_67 = arith.constant dense<0.000000e+00> : vector<17x48xf32>
    %173 = tpu.matmul %170, %172, %cst_67 {dimension_numbers = #tpu.dot_dimension_numbers<[1], [0], [0], [1], [0, 0, 1, 1], [], []>} : vector<17x96xbf16>, vector<96x48xbf16>, vector<17x48xf32> -> vector<17x48xf32>
    %c0_68 = arith.constant 0 : index
    %c0_69 = arith.constant 0 : index
    %c0_70 = arith.constant 0 : index
    %174 = vector.load %arg16[%c0_68, %c0_69, %c0_70] : memref<1x1x48xf32, #tpu.memory_space<vmem>>, vector<1x1x48xf32>
    %175 = vector.shape_cast %174 : vector<1x1x48xf32> to vector<1x48xf32>
    %176 = vector.broadcast %175 : vector<1x48xf32> to vector<17x48xf32>
    %177 = arith.addf %173, %176 : vector<17x48xf32>
    %178 = arith.addf %127, %177 : vector<17x48xf32>
    %c0_71 = arith.constant 0 : index
    %c0_72 = arith.constant 0 : index
    %179 = vector.load %arg22[%c0_71, %c0_72] : memref<17x48xf32, #tpu.memory_space<vmem>>, vector<17x48xf32>
    tpu.vector_store %arg22[%c0_71, %c0_72], %178 {strides = array<i32>} : memref<17x48xf32, #tpu.memory_space<vmem>>, vector<17x48xf32>,
    %c2_i32 = arith.constant 2 : i32
    %180 = arith.cmpi eq, %arg1, %c2_i32 : i32
    %181 = arith.extui %180 : i1 to i32
    %c0_i32_73 = arith.constant 0 : i32
    %182 = arith.cmpi ne, %181, %c0_i32_73 : i32
    scf.if %182 {
      %183 = vector.extract_strided_slice %178 {offsets = [0, 0], sizes = [1, 48], strides = [1, 1]} : vector<17x48xf32> to vector<1x48xf32>
      %c0_74 = arith.constant 0 : index
      %c0_75 = arith.constant 0 : index
      %184 = vector.load %arg17[%c0_74, %c0_75] : memref<1x48xf32, #tpu.memory_space<vmem>>, vector<1x48xf32>
      %c0_76 = arith.constant 0 : index
      %c0_77 = arith.constant 0 : index
      %185 = vector.load %arg18[%c0_76, %c0_77] : memref<1x48xf32, #tpu.memory_space<vmem>>, vector<1x48xf32>
      %cst_78 = arith.constant dense<0.000000e+00> : vector<1xf32>
      %186 = vector.multi_reduction <add>, %183, %cst_78 [1] : vector<1x48xf32> to vector<1xf32>
      %187 = vector.shape_cast %186 : vector<1xf32> to vector<1x1xf32>
      %cst_79 = arith.constant 4.800000e+01 : f32
      %188 = vector.broadcast %cst_79 : f32 to vector<1x1xf32>
      %189 = arith.divf %187, %188 : vector<1x1xf32>
      %190 = vector.broadcast %189 : vector<1x1xf32> to vector<1x48xf32>
      %191 = arith.subf %183, %190 : vector<1x48xf32>
      %192 = arith.mulf %191, %191 : vector<1x48xf32>
      %cst_80 = arith.constant dense<0.000000e+00> : vector<1xf32>
      %193 = vector.multi_reduction <add>, %192, %cst_80 [1] : vector<1x48xf32> to vector<1xf32>
      %194 = vector.shape_cast %193 : vector<1xf32> to vector<1x1xf32>
      %cst_81 = arith.constant 4.800000e+01 : f32
      %195 = vector.broadcast %cst_81 : f32 to vector<1x1xf32>
      %196 = arith.divf %194, %195 : vector<1x1xf32>
      %197 = vector.broadcast %189 : vector<1x1xf32> to vector<1x48xf32>
      %198 = arith.subf %183, %197 : vector<1x48xf32>
      %cst_82 = arith.constant 9.99999974E-6 : f32
      %199 = vector.broadcast %cst_82 : f32 to vector<1x1xf32>
      %200 = arith.addf %196, %199 : vector<1x1xf32>
      %201 = math.rsqrt %200 : vector<1x1xf32>
      %202 = vector.broadcast %201 : vector<1x1xf32> to vector<1x48xf32>
      %203 = arith.mulf %198, %202 : vector<1x48xf32>
      %204 = arith.mulf %203, %184 : vector<1x48xf32>
      %205 = arith.addf %204, %185 : vector<1x48xf32>
      %206 = arith.truncf %205 : vector<1x48xf32> to vector<1x48xbf16>
      %c0_83 = arith.constant 0 : index
      %c0_84 = arith.constant 0 : index
      %207 = vector.load %arg19[%c0_83, %c0_84] : memref<48x10xbf16, #tpu.memory_space<vmem>>, vector<48x10xbf16>
      %cst_85 = arith.constant dense<0.000000e+00> : vector<1x10xf32>
      %208 = tpu.matmul %206, %207, %cst_85 {dimension_numbers = #tpu.dot_dimension_numbers<[1], [0], [0], [1], [0, 0, 1, 1], [], []>} : vector<1x48xbf16>, vector<48x10xbf16>, vector<1x10xf32> -> vector<1x10xf32>
      %c0_86 = arith.constant 0 : index
      %c0_87 = arith.constant 0 : index
      %209 = vector.load %arg20[%c0_86, %c0_87] : memref<1x10xf32, #tpu.memory_space<vmem>>, vector<1x10xf32>
      %210 = arith.addf %208, %209 : vector<1x10xf32>
      %c0_88 = arith.constant 0 : index
      %c0_89 = arith.constant 0 : index
      %c0_90 = arith.constant 0 : index
      %211 = vector.load %arg21[%c0_88, %c0_89, %c0_90] : memref<1x1x10xf32, #tpu.memory_space<vmem>>, vector<1x1x10xf32>
      %212 = vector.shape_cast %211 : vector<1x1x10xf32> to vector<1x10xf32>
      %213 = vector.shape_cast %210 : vector<1x10xf32> to vector<1x1x10xf32>
      tpu.vector_store %arg21[%c0_88, %c0_89, %c0_90], %213 {strides = array<i32>} : memref<1x1x10xf32, #tpu.memory_space<vmem>>, vector<1x1x10xf32>,
    } else {
    }
    return
  }
  func.func @transform_0(%arg0: i32, %arg1: i32) -> (i32, i32, i32) {
    %c0_i32 = arith.constant 0 : i32
    %c0_i32_0 = arith.constant 0 : i32
    %c0_i32_1 = arith.constant 0 : i32
    return %arg0, %c0_i32, %c0_i32_0 : i32, i32, i32
  }
  func.func @transform_1(%arg0: i32, %arg1: i32) -> (i32, i32, i32) {
    %c0_i32 = arith.constant 0 : i32
    %c0_i32_0 = arith.constant 0 : i32
    %c0_i32_1 = arith.constant 0 : i32
    %c0_i32_2 = arith.constant 0 : i32
    return %c0_i32, %c0_i32_0, %c0_i32_1 : i32, i32, i32
  }
  func.func @transform_2(%arg0: i32, %arg1: i32) -> (i32, i32) {
    %c0_i32 = arith.constant 0 : i32
    %c0_i32_0 = arith.constant 0 : i32
    %c0_i32_1 = arith.constant 0 : i32
    return %c0_i32, %c0_i32_0 : i32, i32
  }
  func.func @transform_3(%arg0: i32, %arg1: i32) -> (i32, i32) {
    %c0_i32 = arith.constant 0 : i32
    %c0_i32_0 = arith.constant 0 : i32
    %c0_i32_1 = arith.constant 0 : i32
    return %c0_i32, %c0_i32_0 : i32, i32
  }
  func.func @transform_4(%arg0: i32, %arg1: i32) -> (i32, i32, i32) {
    %c0_i32 = arith.constant 0 : i32
    %c0_i32_0 = arith.constant 0 : i32
    %c0_i32_1 = arith.constant 0 : i32
    return %arg1, %c0_i32, %c0_i32_0 : i32, i32, i32
  }
  func.func @transform_5(%arg0: i32, %arg1: i32) -> (i32, i32, i32) {
    %c0_i32 = arith.constant 0 : i32
    %c0_i32_0 = arith.constant 0 : i32
    %c0_i32_1 = arith.constant 0 : i32
    return %arg1, %c0_i32, %c0_i32_0 : i32, i32, i32
  }
  func.func @transform_6(%arg0: i32, %arg1: i32) -> (i32, i32, i32) {
    %c0_i32 = arith.constant 0 : i32
    %c0_i32_0 = arith.constant 0 : i32
    %c0_i32_1 = arith.constant 0 : i32
    return %arg1, %c0_i32, %c0_i32_0 : i32, i32, i32
  }
  func.func @transform_7(%arg0: i32, %arg1: i32) -> (i32, i32, i32) {
    %c0_i32 = arith.constant 0 : i32
    %c0_i32_0 = arith.constant 0 : i32
    %c0_i32_1 = arith.constant 0 : i32
    return %arg1, %c0_i32, %c0_i32_0 : i32, i32, i32
  }
  func.func @transform_8(%arg0: i32, %arg1: i32) -> (i32, i32, i32) {
    %c0_i32 = arith.constant 0 : i32
    %c0_i32_0 = arith.constant 0 : i32
    %c0_i32_1 = arith.constant 0 : i32
    return %arg1, %c0_i32, %c0_i32_0 : i32, i32, i32
  }
  func.func @transform_9(%arg0: i32, %arg1: i32) -> (i32, i32, i32) {
    %c0_i32 = arith.constant 0 : i32
    %c0_i32_0 = arith.constant 0 : i32
    %c0_i32_1 = arith.constant 0 : i32
    return %arg1, %c0_i32, %c0_i32_0 : i32, i32, i32
  }
  func.func @transform_10(%arg0: i32, %arg1: i32) -> (i32, i32, i32) {
    %c0_i32 = arith.constant 0 : i32
    %c0_i32_0 = arith.constant 0 : i32
    %c0_i32_1 = arith.constant 0 : i32
    return %arg1, %c0_i32, %c0_i32_0 : i32, i32, i32
  }
  func.func @transform_11(%arg0: i32, %arg1: i32) -> (i32, i32, i32) {
    %c0_i32 = arith.constant 0 : i32
    %c0_i32_0 = arith.constant 0 : i32
    %c0_i32_1 = arith.constant 0 : i32
    return %arg1, %c0_i32, %c0_i32_0 : i32, i32, i32
  }
  func.func @transform_12(%arg0: i32, %arg1: i32) -> (i32, i32, i32) {
    %c0_i32 = arith.constant 0 : i32
    %c0_i32_0 = arith.constant 0 : i32
    %c0_i32_1 = arith.constant 0 : i32
    return %arg1, %c0_i32, %c0_i32_0 : i32, i32, i32
  }
  func.func @transform_13(%arg0: i32, %arg1: i32) -> (i32, i32, i32) {
    %c0_i32 = arith.constant 0 : i32
    %c0_i32_0 = arith.constant 0 : i32
    %c0_i32_1 = arith.constant 0 : i32
    return %arg1, %c0_i32, %c0_i32_0 : i32, i32, i32
  }
  func.func @transform_14(%arg0: i32, %arg1: i32) -> (i32, i32, i32) {
    %c0_i32 = arith.constant 0 : i32
    %c0_i32_0 = arith.constant 0 : i32
    %c0_i32_1 = arith.constant 0 : i32
    return %arg1, %c0_i32, %c0_i32_0 : i32, i32, i32
  }
  func.func @transform_15(%arg0: i32, %arg1: i32) -> (i32, i32) {
    %c0_i32 = arith.constant 0 : i32
    %c0_i32_0 = arith.constant 0 : i32
    %c0_i32_1 = arith.constant 0 : i32
    return %c0_i32, %c0_i32_0 : i32, i32
  }
  func.func @transform_16(%arg0: i32, %arg1: i32) -> (i32, i32) {
    %c0_i32 = arith.constant 0 : i32
    %c0_i32_0 = arith.constant 0 : i32
    %c0_i32_1 = arith.constant 0 : i32
    return %c0_i32, %c0_i32_0 : i32, i32
  }
  func.func @transform_17(%arg0: i32, %arg1: i32) -> (i32, i32) {
    %c0_i32 = arith.constant 0 : i32
    %c0_i32_0 = arith.constant 0 : i32
    %c0_i32_1 = arith.constant 0 : i32
    return %c0_i32, %c0_i32_0 : i32, i32
  }
  func.func @transform_18(%arg0: i32, %arg1: i32) -> (i32, i32) {
    %c0_i32 = arith.constant 0 : i32
    %c0_i32_0 = arith.constant 0 : i32
    %c0_i32_1 = arith.constant 0 : i32
    return %c0_i32, %c0_i32_0 : i32, i32
  }
  func.func @transform_19(%arg0: i32, %arg1: i32) -> (i32, i32, i32) {
    %c0_i32 = arith.constant 0 : i32
    %c0_i32_0 = arith.constant 0 : i32
    %c0_i32_1 = arith.constant 0 : i32
    return %arg0, %c0_i32, %c0_i32_0 : i32, i32, i32
  }
}

</mosaic_0001>

<llo_original>
// kernel: tpu_custom_call.1
$region0: #{tpu_custom_call.1}
  #allocation0 [shape = 'u32[]', space=smem, size = 0x4, offset = 0x4, fixed_abs, tag = 'smem constant byte address 0x4 - core index']
  #allocation1 [shape = 'u32[72,128]{1,0:T(1,128)}', space=vmem, size = 0x9000, scoped, tag = 'internal scratch']
  #allocation2 [shape = 'f32[17,48]{1,0:T(8,128)}', space=vmem, size = 0x3000, scoped, tag = 'scratch operand']
  %s0 = inlined_call_operand.vmem [shape: bf16[2,17,48], index: 0, kind: input, shape index: {}]
  %s1 = inlined_call_operand.vmem [shape: f32[1,17,48], index: 1, kind: input, shape index: {}]
  %s2 = inlined_call_operand.vmem [shape: bf16[48,48], index: 2, kind: input, shape index: {}]
  %s3 = inlined_call_operand.vmem [shape: f32[1,48], index: 3, kind: input, shape index: {}]
  %s4 = inlined_call_operand.vmem [shape: f32[3,1,48], index: 4, kind: input, shape index: {}]
  %s5 = inlined_call_operand.vmem [shape: f32[3,1,48], index: 5, kind: input, shape index: {}]
  %s6 = inlined_call_operand.vmem [shape: bf16[3,48,144], index: 6, kind: input, shape index: {}]
  %s7 = inlined_call_operand.vmem [shape: bf16[3,48,48], index: 7, kind: input, shape index: {}]
  %s8 = inlined_call_operand.vmem [shape: f32[3,1,48], index: 8, kind: input, shape index: {}]
  %s9 = inlined_call_operand.vmem [shape: f32[3,1,48], index: 9, kind: input, shape index: {}]
  %s10 = inlined_call_operand.vmem [shape: f32[3,1,48], index: 10, kind: input, shape index: {}]
  %s11 = inlined_call_operand.hbm [shape: bf16[3,48,96], index: 11, kind: input, shape index: {}]
  %s12 = inlined_call_operand.vmem [shape: f32[3,1,96], index: 12, kind: input, shape index: {}]
  %s13 = inlined_call_operand.vmem [shape: bf16[3,96,48], index: 13, kind: input, shape index: {}]
  %s14 = inlined_call_operand.vmem [shape: f32[3,1,48], index: 14, kind: input, shape index: {}]
  %s15 = inlined_call_operand.hbm [shape: f32[1,48], index: 15, kind: input, shape index: {}]
  %s16 = inlined_call_operand.vmem [shape: f32[1,48], index: 16, kind: input, shape index: {}]
  %s17 = inlined_call_operand.vmem [shape: bf16[48,10], index: 17, kind: input, shape index: {}]
  %s18 = inlined_call_operand.vmem [shape: f32[1,10], index: 18, kind: input, shape index: {}]
  %s19 = inlined_call_operand.hbm [shape: f32[2,1,10], index: 19, kind: output, shape index: {}]
  %s20 = sld [smem:[#allocation0]]
  $region125: #{tpu_custom_call.1} parent=0
    _
  %s22 = ssub.s32 1, %s20
  %s23 = scalar_select 0, %s22, %s20
  $region1: #{tpu_custom_call.1} parent=0
    #allocation3 [shape = 'u8[24576]{0}', space=vmem, size = 0x6000, scoped, tag = 'input window, operand 11']
    #allocation4 [shape = 's32[2]{0}', space=sflag, size = 0x8, scoped, tag = 'scoped memory for tpu_custom_call.1']
    #allocation5 [shape = 's32[2]{0}', space=sflag, size = 0x8, scoped, tag = 'scoped memory for tpu_custom_call.1']
    #allocation6 [shape = 'u8[512]{0}', space=vmem, size = 0x400, scoped, tag = 'input window, operand 15, single buffered']
    #allocation7 [shape = 's32[1]{0}', space=sflag, size = 0x4, scoped, tag = 'scoped memory for tpu_custom_call.1']
    #allocation8 [shape = 'u8[1024]{0}', space=vmem, size = 0x400, scoped, tag = 'output window, operand 0']
    %24 = vsyncpa [#allocation4], 0
    %s25 = scalar_lea.sflag [#allocation4], 1
    %26 = vsyncpa %s25, 0
    %27 = vsyncpa [#allocation7], 0
    %28 = vsyncpa [#allocation5], 0
    %s29 = scalar_lea.sflag [#allocation5], 1
    %30 = vsyncpa %s29, 0
    loop: start=0, step=1, limit=8
    $region2: #{tpu_custom_call.1} parent=1 // loop_pre_header
      _
    $region3: #{tpu_custom_call.1} parent=1 // loop_header
      %s32 = sphi 0, %s36
      %p33 = scmp.ge.s32.totalorder %s32, 8
      %s39 = sphi 0, %s51
      %s40 = sphi 0, %s47
      %s41 = sphi 0, %s39
      %s42 = sphi 0, %s40
      %s43 = sphi 0, %s41
      %s44 = sphi 0, %s42
      %s54 = sphi 0, %s56
      %s57 = sphi 0, %s54
      %s58 = sphi 0, %s57
      %s74 = sphi 0, %s58
      %s78 = sphi 0, %s78
      %s80 = sphi 0, %s78
      %s81 = sphi 0, %s80
      %s95 = sphi 0, %s81
      %s99 = sphi 0, %s99
      %s101 = sphi 0, %s99
      %s102 = sphi 0, %s101
      %s116 = sphi 0, %s102
      %s120 = sphi 0, %s120
      %s122 = sphi 0, %s120
      %s123 = sphi 0, %s122
      %s137 = sphi 0, %s123
      %s143 = sphi 0, %s145
      %s146 = sphi 0, %s143
      %s147 = sphi 0, %s146
      %s163 = sphi 0, %s147
      %s169 = sphi 0, %s171
      %s172 = sphi 0, %s169
      %s173 = sphi 0, %s172
      %s189 = sphi 0, %s173
      %s195 = sphi 0, %s197
      %s198 = sphi 0, %s195
      %s199 = sphi 0, %s198
      %s215 = sphi 0, %s199
      %s221 = sphi 0, %s223
      %s224 = sphi 0, %s221
      %s225 = sphi 0, %s224
      %s241 = sphi 0, %s225
      %s247 = sphi 0, %s249
      %s250 = sphi 0, %s247
      %s251 = sphi 0, %s250
      %s267 = sphi 0, %s251
      %s273 = sphi 0, %s275
      %s276 = sphi 0, %s273
      %s277 = sphi 0, %s276
      %s293 = sphi 0, %s277
      %s299 = sphi 0, %s301
      %s302 = sphi 0, %s299
      %s303 = sphi 0, %s302
      %s319 = sphi 0, %s303
      %s325 = sphi 0, %s327
      %s328 = sphi 0, %s325
      %s329 = sphi 0, %s328
      %s345 = sphi 0, %s329
      %s351 = sphi 0, %s353
      %s354 = sphi 0, %s351
      %s355 = sphi 0, %s354
      %s371 = sphi 0, %s355
      %s377 = sphi 0, %s379
      %s380 = sphi 0, %s377
      %s381 = sphi 0, %s380
      %s397 = sphi 0, %s381
      %s403 = sphi 0, %s405
      %s406 = sphi 0, %s403
      %s407 = sphi 0, %s406
      %s423 = sphi 0, %s407
      %s427 = sphi 0, %s427
      %s429 = sphi 0, %s427
      %s430 = sphi 0, %s429
      %s444 = sphi 0, %s430
      %s448 = sphi 0, %s448
      %s450 = sphi 0, %s448
      %s451 = sphi 0, %s450
      %s465 = sphi 0, %s451
      %s469 = sphi 0, %s469
      %s471 = sphi 0, %s469
      %s472 = sphi 0, %s471
      %s486 = sphi 0, %s472
      %s490 = sphi 0, %s490
      %s492 = sphi 0, %s490
      %s493 = sphi 0, %s492
      %s507 = sphi 0, %s493
      %s513 = sphi 0, %s515
      %s516 = sphi 0, %s513
      %s517 = sphi 0, %s516
      %s533 = sphi 0, %s517
    $region4: #{tpu_custom_call.1} parent=1 // loop_header_branch
      %35 = sbr.rel (%p33) target = $region8
    $region5: #{tpu_custom_call.1} parent=1 // loop_body
      %s37 = ssub.s32 %s32, 1
      %s38 = ssub.s32 %s32, 2
      %s45 = sadd.s32 1, %s40
      %p46 = scmp.ge.s32.totalorder %s45, 3
      %s47 = scalar_select %p46, 0, %s45
      %s48 = sadd.s32 1, %s39
      %s49 = scalar_select %p46, %s48, %s39
      %p50 = scmp.ge.s32.totalorder %s49, 2
      %s51 = scalar_select %p50, 0, %s49
      %s52 = ssub.s32 %s39, %s51
      %p53 = scmp.eq.s32.totalorder %s52, 0
      %s55 = sadd.s32 %s54, 1
      %s56 = scalar_select %p53, %s54, %s55
      %p59 = pneg %p53
      %p60 = scmp.eq.s32.totalorder %s32, 5
      %p61 = por %p59, %p60
      %p62 = scmp.ne.s32.totalorder %s54, %s57
      %p63 = scmp.eq.s32.totalorder %s32, 0
      %p64 = por %p62, %p63
      %p65 = scmp.ne.s32.totalorder %s54, %s57
      %p66 = scmp.eq.s32.totalorder %s37, 5
      %p67 = por %p65, %p66
      %p68 = scmp.ne.s32.totalorder %s57, %s58
      %p69 = scmp.eq.s32.totalorder %s37, 0
      %p70 = por %p68, %p69
      %p71 = scmp.ne.s32.totalorder %s57, %s58
      %p72 = scmp.eq.s32.totalorder %s38, 5
      %p73 = por %p71, %p72
      %p75 = scmp.ne.s32.totalorder %s58, %s74
      %p76 = scmp.eq.s32.totalorder %s38, 0
      %p77 = por %p75, %p76
      %s79 = sadd.s32 %s78, 1
      %p82 = scmp.eq.s32.totalorder %s32, 5
      %p83 = scmp.ne.s32.totalorder %s78, %s80
      %p84 = scmp.eq.s32.totalorder %s32, 0
      %p85 = por %p83, %p84
      %p86 = scmp.ne.s32.totalorder %s78, %s80
      %p87 = scmp.eq.s32.totalorder %s37, 5
      %p88 = por %p86, %p87
      %p89 = scmp.ne.s32.totalorder %s80, %s81
      %p90 = scmp.eq.s32.totalorder %s37, 0
      %p91 = por %p89, %p90
      %p92 = scmp.ne.s32.totalorder %s80, %s81
      %p93 = scmp.eq.s32.totalorder %s38, 5
      %p94 = por %p92, %p93
      %p96 = scmp.ne.s32.totalorder %s81, %s95
      %p97 = scmp.eq.s32.totalorder %s38, 0
      %p98 = por %p96, %p97
      %s100 = sadd.s32 %s99, 1
      %p103 = scmp.eq.s32.totalorder %s32, 5
      %p104 = scmp.ne.s32.totalorder %s99, %s101
      %p105 = scmp.eq.s32.totalorder %s32, 0
      %p106 = por %p104, %p105
      %p107 = scmp.ne.s32.totalorder %s99, %s101
      %p108 = scmp.eq.s32.totalorder %s37, 5
      %p109 = por %p107, %p108
      %p110 = scmp.ne.s32.totalorder %s101, %s102
      %p111 = scmp.eq.s32.totalorder %s37, 0
      %p112 = por %p110, %p111
      %p113 = scmp.ne.s32.totalorder %s101, %s102
      %p114 = scmp.eq.s32.totalorder %s38, 5
      %p115 = por %p113, %p114
      %p117 = scmp.ne.s32.totalorder %s102, %s116
      %p118 = scmp.eq.s32.totalorder %s38, 0
      %p119 = por %p117, %p118
      %s121 = sadd.s32 %s120, 1
      %p124 = scmp.eq.s32.totalorder %s32, 5
      %p125 = scmp.ne.s32.totalorder %s120, %s122
      %p126 = scmp.eq.s32.totalorder %s32, 0
      %p127 = por %p125, %p126
      %p128 = scmp.ne.s32.totalorder %s120, %s122
      %p129 = scmp.eq.s32.totalorder %s37, 5
      %p130 = por %p128, %p129
      %p131 = scmp.ne.s32.totalorder %s122, %s123
      %p132 = scmp.eq.s32.totalorder %s37, 0
      %p133 = por %p131, %p132
      %p134 = scmp.ne.s32.totalorder %s122, %s123
      %p135 = scmp.eq.s32.totalorder %s38, 5
      %p136 = por %p134, %p135
      %p138 = scmp.ne.s32.totalorder %s123, %s137
      %p139 = scmp.eq.s32.totalorder %s38, 0
      %p140 = por %p138, %p139
      %s141 = ssub.s32 %s40, %s47
      %p142 = scmp.eq.s32.totalorder %s141, 0
      %s144 = sadd.s32 %s143, 1
      %s145 = scalar_select %p142, %s143, %s144
      %p148 = pneg %p142
      %p149 = scmp.eq.s32.totalorder %s32, 5
      %p150 = por %p148, %p149
      %p151 = scmp.ne.s32.totalorder %s143, %s146
      %p152 = scmp.eq.s32.totalorder %s32, 0
      %p153 = por %p151, %p152
      %p154 = scmp.ne.s32.totalorder %s143, %s146
      %p155 = scmp.eq.s32.totalorder %s37, 5
      %p156 = por %p154, %p155
      %p157 = scmp.ne.s32.totalorder %s146, %s147
      %p158 = scmp.eq.s32.totalorder %s37, 0
      %p159 = por %p157, %p158
      %p160 = scmp.ne.s32.totalorder %s146, %s147
      %p161 = scmp.eq.s32.totalorder %s38, 5
      %p162 = por %p160, %p161
      %p164 = scmp.ne.s32.totalorder %s147, %s163
      %p165 = scmp.eq.s32.totalorder %s38, 0
      %p166 = por %p164, %p165
      %s167 = ssub.s32 %s40, %s47
      %p168 = scmp.eq.s32.totalorder %s167, 0
      %s170 = sadd.s32 %s169, 1
      %s171 = scalar_select %p168, %s169, %s170
      %p174 = pneg %p168
      %p175 = scmp.eq.s32.totalorder %s32, 5
      %p176 = por %p174, %p175
      %p177 = scmp.ne.s32.totalorder %s169, %s172
      %p178 = scmp.eq.s32.totalorder %s32, 0
      %p179 = por %p177, %p178
      %p180 = scmp.ne.s32.totalorder %s169, %s172
      %p181 = scmp.eq.s32.totalorder %s37, 5
      %p182 = por %p180, %p181
      %p183 = scmp.ne.s32.totalorder %s172, %s173
      %p184 = scmp.eq.s32.totalorder %s37, 0
      %p185 = por %p183, %p184
      %p186 = scmp.ne.s32.totalorder %s172, %s173
      %p187 = scmp.eq.s32.totalorder %s38, 5
      %p188 = por %p186, %p187
      %p190 = scmp.ne.s32.totalorder %s173, %s189
      %p191 = scmp.eq.s32.totalorder %s38, 0
      %p192 = por %p190, %p191
      %s193 = ssub.s32 %s40, %s47
      %p194 = scmp.eq.s32.totalorder %s193, 0
      %s196 = sadd.s32 %s195, 1
      %s197 = scalar_select %p194, %s195, %s196
      %p200 = pneg %p194
      %p201 = scmp.eq.s32.totalorder %s32, 5
      %p202 = por %p200, %p201
      %p203 = scmp.ne.s32.totalorder %s195, %s198
      %p204 = scmp.eq.s32.totalorder %s32, 0
      %p205 = por %p203, %p204
      %p206 = scmp.ne.s32.totalorder %s195, %s198
      %p207 = scmp.eq.s32.totalorder %s37, 5
      %p208 = por %p206, %p207
      %p209 = scmp.ne.s32.totalorder %s198, %s199
      %p210 = scmp.eq.s32.totalorder %s37, 0
      %p211 = por %p209, %p210
      %p212 = scmp.ne.s32.totalorder %s198, %s199
      %p213 = scmp.eq.s32.totalorder %s38, 5
      %p214 = por %p212, %p213
      %p216 = scmp.ne.s32.totalorder %s199, %s215
      %p217 = scmp.eq.s32.totalorder %s38, 0
      %p218 = por %p216, %p217
      %s219 = ssub.s32 %s40, %s47
      %p220 = scmp.eq.s32.totalorder %s219, 0
      %s222 = sadd.s32 %s221, 1
      %s223 = scalar_select %p220, %s221, %s222
      %p226 = pneg %p220
      %p227 = scmp.eq.s32.totalorder %s32, 5
      %p228 = por %p226, %p227
      %p229 = scmp.ne.s32.totalorder %s221, %s224
      %p230 = scmp.eq.s32.totalorder %s32, 0
      %p231 = por %p229, %p230
      %p232 = scmp.ne.s32.totalorder %s221, %s224
      %p233 = scmp.eq.s32.totalorder %s37, 5
      %p234 = por %p232, %p233
      %p235 = scmp.ne.s32.totalorder %s224, %s225
      %p236 = scmp.eq.s32.totalorder %s37, 0
      %p237 = por %p235, %p236
      %p238 = scmp.ne.s32.totalorder %s224, %s225
      %p239 = scmp.eq.s32.totalorder %s38, 5
      %p240 = por %p238, %p239
      %p242 = scmp.ne.s32.totalorder %s225, %s241
      %p243 = scmp.eq.s32.totalorder %s38, 0
      %p244 = por %p242, %p243
      %s245 = ssub.s32 %s40, %s47
      %p246 = scmp.eq.s32.totalorder %s245, 0
      %s248 = sadd.s32 %s247, 1
      %s249 = scalar_select %p246, %s247, %s248
      %p252 = pneg %p246
      %p253 = scmp.eq.s32.totalorder %s32, 5
      %p254 = por %p252, %p253
      %p255 = scmp.ne.s32.totalorder %s247, %s250
      %p256 = scmp.eq.s32.totalorder %s32, 0
      %p257 = por %p255, %p256
      %p258 = scmp.ne.s32.totalorder %s247, %s250
      %p259 = scmp.eq.s32.totalorder %s37, 5
      %p260 = por %p258, %p259
      %p261 = scmp.ne.s32.totalorder %s250, %s251
      %p262 = scmp.eq.s32.totalorder %s37, 0
      %p263 = por %p261, %p262
      %p264 = scmp.ne.s32.totalorder %s250, %s251
      %p265 = scmp.eq.s32.totalorder %s38, 5
      %p266 = por %p264, %p265
      %p268 = scmp.ne.s32.totalorder %s251, %s267
      %p269 = scmp.eq.s32.totalorder %s38, 0
      %p270 = por %p268, %p269
      %s271 = ssub.s32 %s40, %s47
      %p272 = scmp.eq.s32.totalorder %s271, 0
      %s274 = sadd.s32 %s273, 1
      %s275 = scalar_select %p272, %s273, %s274
      %p278 = pneg %p272
      %p279 = scmp.eq.s32.totalorder %s32, 5
      %p280 = por %p278, %p279
      %p281 = scmp.ne.s32.totalorder %s273, %s276
      %p282 = scmp.eq.s32.totalorder %s32, 0
      %p283 = por %p281, %p282
      %p284 = scmp.ne.s32.totalorder %s273, %s276
      %p285 = scmp.eq.s32.totalorder %s37, 5
      %p286 = por %p284, %p285
      %p287 = scmp.ne.s32.totalorder %s276, %s277
      %p288 = scmp.eq.s32.totalorder %s37, 0
      %p289 = por %p287, %p288
      %p290 = scmp.ne.s32.totalorder %s276, %s277
      %p291 = scmp.eq.s32.totalorder %s38, 5
      %p292 = por %p290, %p291
      %p294 = scmp.ne.s32.totalorder %s277, %s293
      %p295 = scmp.eq.s32.totalorder %s38, 0
      %p296 = por %p294, %p295
      %s297 = ssub.s32 %s40, %s47
      %p298 = scmp.eq.s32.totalorder %s297, 0
      %s300 = sadd.s32 %s299, 1
      %s301 = scalar_select %p298, %s299, %s300
      %p304 = pneg %p298
      %p305 = scmp.eq.s32.totalorder %s32, 5
      %p306 = por %p304, %p305
      %p307 = scmp.ne.s32.totalorder %s299, %s302
      %p308 = scmp.eq.s32.totalorder %s32, 0
      %p309 = por %p307, %p308
      %p310 = scmp.ne.s32.totalorder %s299, %s302
      %p311 = scmp.eq.s32.totalorder %s37, 5
      %p312 = por %p310, %p311
      %p313 = scmp.ne.s32.totalorder %s302, %s303
      %p314 = scmp.eq.s32.totalorder %s37, 0
      %p315 = por %p313, %p314
      %p316 = scmp.ne.s32.totalorder %s302, %s303
      %p317 = scmp.eq.s32.totalorder %s38, 5
      %p318 = por %p316, %p317
      %p320 = scmp.ne.s32.totalorder %s303, %s319
      %p321 = scmp.eq.s32.totalorder %s38, 0
      %p322 = por %p320, %p321
      %s323 = ssub.s32 %s40, %s47
      %p324 = scmp.eq.s32.totalorder %s323, 0
      %s326 = sadd.s32 %s325, 1
      %s327 = scalar_select %p324, %s325, %s326
      %p330 = pneg %p324
      %p331 = scmp.eq.s32.totalorder %s32, 5
      %p332 = por %p330, %p331
      %p333 = scmp.ne.s32.totalorder %s325, %s328
      %p334 = scmp.eq.s32.totalorder %s32, 0
      %p335 = por %p333, %p334
      %p336 = scmp.ne.s32.totalorder %s325, %s328
      %p337 = scmp.eq.s32.totalorder %s37, 5
      %p338 = por %p336, %p337
      %p339 = scmp.ne.s32.totalorder %s328, %s329
      %p340 = scmp.eq.s32.totalorder %s37, 0
      %p341 = por %p339, %p340
      %p342 = scmp.ne.s32.totalorder %s328, %s329
      %p343 = scmp.eq.s32.totalorder %s38, 5
      %p344 = por %p342, %p343
      %p346 = scmp.ne.s32.totalorder %s329, %s345
      %p347 = scmp.eq.s32.totalorder %s38, 0
      %p348 = por %p346, %p347
      %s349 = ssub.s32 %s40, %s47
      %p350 = scmp.eq.s32.totalorder %s349, 0
      %s352 = sadd.s32 %s351, 1
      %s353 = scalar_select %p350, %s351, %s352
      %p356 = pneg %p350
      %p357 = scmp.eq.s32.totalorder %s32, 5
      %p358 = por %p356, %p357
      %p359 = scmp.ne.s32.totalorder %s351, %s354
      %p360 = scmp.eq.s32.totalorder %s32, 0
      %p361 = por %p359, %p360
      %p362 = scmp.ne.s32.totalorder %s351, %s354
      %p363 = scmp.eq.s32.totalorder %s37, 5
      %p364 = por %p362, %p363
      %p365 = scmp.ne.s32.totalorder %s354, %s355
      %p366 = scmp.eq.s32.totalorder %s37, 0
      %p367 = por %p365, %p366
      %p368 = scmp.ne.s32.totalorder %s354, %s355
      %p369 = scmp.eq.s32.totalorder %s38, 5
      %p370 = por %p368, %p369
      %p372 = scmp.ne.s32.totalorder %s355, %s371
      %p373 = scmp.eq.s32.totalorder %s38, 0
      %p374 = por %p372, %p373
      %s375 = ssub.s32 %s40, %s47
      %p376 = scmp.eq.s32.totalorder %s375, 0
      %s378 = sadd.s32 %s377, 1
      %s379 = scalar_select %p376, %s377, %s378
      %p382 = pneg %p376
      %p383 = scmp.eq.s32.totalorder %s32, 5
      %p384 = por %p382, %p383
      %p385 = scmp.ne.s32.totalorder %s377, %s380
      %p386 = scmp.eq.s32.totalorder %s32, 0
      %p387 = por %p385, %p386
      %p388 = scmp.ne.s32.totalorder %s377, %s380
      %p389 = scmp.eq.s32.totalorder %s37, 5
      %p390 = por %p388, %p389
      %p391 = scmp.ne.s32.totalorder %s380, %s381
      %p392 = scmp.eq.s32.totalorder %s37, 0
      %p393 = por %p391, %p392
      %p394 = scmp.ne.s32.totalorder %s380, %s381
      %p395 = scmp.eq.s32.totalorder %s38, 5
      %p396 = por %p394, %p395
      %p398 = scmp.ne.s32.totalorder %s381, %s397
      %p399 = scmp.eq.s32.totalorder %s38, 0
      %p400 = por %p398, %p399
      %s401 = ssub.s32 %s40, %s47
      %p402 = scmp.eq.s32.totalorder %s401, 0
      %s404 = sadd.s32 %s403, 1
      %s405 = scalar_select %p402, %s403, %s404
      %p408 = pneg %p402
      %p409 = scmp.eq.s32.totalorder %s32, 5
      %p410 = por %p408, %p409
      %p411 = scmp.ne.s32.totalorder %s403, %s406
      %p412 = scmp.eq.s32.totalorder %s32, 0
      %p413 = por %p411, %p412
      %p414 = scmp.ne.s32.totalorder %s403, %s406
      %p415 = scmp.eq.s32.totalorder %s37, 5
      %p416 = por %p414, %p415
      %p417 = scmp.ne.s32.totalorder %s406, %s407
      %p418 = scmp.eq.s32.totalorder %s37, 0
      %p419 = por %p417, %p418
      %p420 = scmp.ne.s32.totalorder %s406, %s407
      %p421 = scmp.eq.s32.totalorder %s38, 5
      %p422 = por %p420, %p421
      %p424 = scmp.ne.s32.totalorder %s407, %s423
      %p425 = scmp.eq.s32.totalorder %s38, 0
      %p426 = por %p424, %p425
      %s428 = sadd.s32 %s427, 1
      %p431 = scmp.eq.s32.totalorder %s32, 5
      %p432 = scmp.ne.s32.totalorder %s427, %s429
      %p433 = scmp.eq.s32.totalorder %s32, 0
      %p434 = por %p432, %p433
      %p435 = scmp.ne.s32.totalorder %s427, %s429
      %p436 = scmp.eq.s32.totalorder %s37, 5
      %p437 = por %p435, %p436
      %p438 = scmp.ne.s32.totalorder %s429, %s430
      %p439 = scmp.eq.s32.totalorder %s37, 0
      %p440 = por %p438, %p439
      %p441 = scmp.ne.s32.totalorder %s429, %s430
      %p442 = scmp.eq.s32.totalorder %s38, 5
      %p443 = por %p441, %p442
      %p445 = scmp.ne.s32.totalorder %s430, %s444
      %p446 = scmp.eq.s32.totalorder %s38, 0
      %p447 = por %p445, %p446
      %s449 = sadd.s32 %s448, 1
      %p452 = scmp.eq.s32.totalorder %s32, 5
      %p453 = scmp.ne.s32.totalorder %s448, %s450
      %p454 = scmp.eq.s32.totalorder %s32, 0
      %p455 = por %p453, %p454
      %p456 = scmp.ne.s32.totalorder %s448, %s450
      %p457 = scmp.eq.s32.totalorder %s37, 5
      %p458 = por %p456, %p457
      %p459 = scmp.ne.s32.totalorder %s450, %s451
      %p460 = scmp.eq.s32.totalorder %s37, 0
      %p461 = por %p459, %p460
      %p462 = scmp.ne.s32.totalorder %s450, %s451
      %p463 = scmp.eq.s32.totalorder %s38, 5
      %p464 = por %p462, %p463
      %p466 = scmp.ne.s32.totalorder %s451, %s465
      %p467 = scmp.eq.s32.totalorder %s38, 0
      %p468 = por %p466, %p467
      %s470 = sadd.s32 %s469, 1
      %p473 = scmp.eq.s32.totalorder %s32, 5
      %p474 = scmp.ne.s32.totalorder %s469, %s471
      %p475 = scmp.eq.s32.totalorder %s32, 0
      %p476 = por %p474, %p475
      %p477 = scmp.ne.s32.totalorder %s469, %s471
      %p478 = scmp.eq.s32.totalorder %s37, 5
      %p479 = por %p477, %p478
      %p480 = scmp.ne.s32.totalorder %s471, %s472
      %p481 = scmp.eq.s32.totalorder %s37, 0
      %p482 = por %p480, %p481
      %p483 = scmp.ne.s32.totalorder %s471, %s472
      %p484 = scmp.eq.s32.totalorder %s38, 5
      %p485 = por %p483, %p484
      %p487 = scmp.ne.s32.totalorder %s472, %s486
      %p488 = scmp.eq.s32.totalorder %s38, 0
      %p489 = por %p487, %p488
      %s491 = sadd.s32 %s490, 1
      %p494 = scmp.eq.s32.totalorder %s32, 5
      %p495 = scmp.ne.s32.totalorder %s490, %s492
      %p496 = scmp.eq.s32.totalorder %s32, 0
      %p497 = por %p495, %p496
      %p498 = scmp.ne.s32.totalorder %s490, %s492
      %p499 = scmp.eq.s32.totalorder %s37, 5
      %p500 = por %p498, %p499
      %p501 = scmp.ne.s32.totalorder %s492, %s493
      %p502 = scmp.eq.s32.totalorder %s37, 0
      %p503 = por %p501, %p502
      %p504 = scmp.ne.s32.totalorder %s492, %s493
      %p505 = scmp.eq.s32.totalorder %s38, 5
      %p506 = por %p504, %p505
      %p508 = scmp.ne.s32.totalorder %s493, %s507
      %p509 = scmp.eq.s32.totalorder %s38, 0
      %p510 = por %p508, %p509
      %s511 = ssub.s32 %s39, %s51
      %p512 = scmp.eq.s32.totalorder %s511, 0
      %s514 = sadd.s32 %s513, 1
      %s515 = scalar_select %p512, %s513, %s514
      %p518 = pneg %p512
      %p519 = scmp.eq.s32.totalorder %s32, 5
      %p520 = por %p518, %p519
      %p521 = scmp.ne.s32.totalorder %s513, %s516
      %p522 = scmp.eq.s32.totalorder %s32, 0
      %p523 = por %p521, %p522
      %p524 = scmp.ne.s32.totalorder %s513, %s516
      %p525 = scmp.eq.s32.totalorder %s37, 5
      %p526 = por %p524, %p525
      %p527 = scmp.ne.s32.totalorder %s516, %s517
      %p528 = scmp.eq.s32.totalorder %s37, 0
      %p529 = por %p527, %p528
      %p530 = scmp.ne.s32.totalorder %s516, %s517
      %p531 = scmp.eq.s32.totalorder %s38, 5
      %p532 = por %p530, %p531
      %p534 = scmp.ne.s32.totalorder %s517, %s533
      %p535 = scmp.eq.s32.totalorder %s38, 0
      %p536 = por %p534, %p535
      %p537 = scmp.le.s32.totalorder 1, %s32
      %p538 = scmp.lt.s32.totalorder %s32, 7
      %p539 = pnand %p537, %p538
      %p540 = pneg %p539
      // Predicated region
      $region9: #{tpu_custom_call.1} parent=5 // pred_check
        _
      $region10: #{tpu_custom_call.1} parent=5 // pred_check_branch
        %542 = sbr.rel (%p539) target = $region12
      $region11: #{tpu_custom_call.1} parent=5 // pred_region
        %s543 = ssub.s32 %s32, 1
        // Predicated region
        $region13: #{tpu_custom_call.1} parent=11 // pred_check
          %p544 = pneg %p91
        $region14: #{tpu_custom_call.1} parent=11 // pred_check_branch
          %546 = sbr.rel (%p544) target = $region16
        $region15: #{tpu_custom_call.1} parent=11 // pred_region
          _
        $region16: #{tpu_custom_call.1} parent=11 // pred_fallthru
          _
        // Predicated region
        $region17: #{tpu_custom_call.1} parent=11 // pred_check
          %p547 = pneg %p112
        $region18: #{tpu_custom_call.1} parent=11 // pred_check_branch
          %549 = sbr.rel (%p547) target = $region20
        $region19: #{tpu_custom_call.1} parent=11 // pred_region
          _
        $region20: #{tpu_custom_call.1} parent=11 // pred_fallthru
          _
        // Predicated region
        $region21: #{tpu_custom_call.1} parent=11 // pred_check
          %p550 = pneg %p133
        $region22: #{tpu_custom_call.1} parent=11 // pred_check_branch
          %552 = sbr.rel (%p550) target = $region24
        $region23: #{tpu_custom_call.1} parent=11 // pred_region
          _
        $region24: #{tpu_custom_call.1} parent=11 // pred_fallthru
          _
        // Predicated region
        $region25: #{tpu_custom_call.1} parent=11 // pred_check
          %p553 = pneg %p440
        $region26: #{tpu_custom_call.1} parent=11 // pred_check_branch
          %555 = sbr.rel (%p553) target = $region28
        $region27: #{tpu_custom_call.1} parent=11 // pred_region
          %557 = vsyncadd [#allocation7], 0
          %s559 = sshll.u32 %s15, 4
          %s560 = int_to_ptr.hbm [resolvable:$true] %s559
          %s561 = sshll.u32 [#allocation6], 4
          %s562 = int_to_ptr.vmem [resolvable:$true] %s561
          %564 = dma.hbm_to_vmem [thread:$0]  %s560, 16, %s562, [#allocation7]
        $region28: #{tpu_custom_call.1} parent=11 // pred_fallthru
          _
        // Predicated region
        $region29: #{tpu_custom_call.1} parent=11 // pred_check
          %p565 = pneg %p461
        $region30: #{tpu_custom_call.1} parent=11 // pred_check_branch
          %567 = sbr.rel (%p565) target = $region32
        $region31: #{tpu_custom_call.1} parent=11 // pred_region
          _
        $region32: #{tpu_custom_call.1} parent=11 // pred_fallthru
          _
        // Predicated region
        $region33: #{tpu_custom_call.1} parent=11 // pred_check
          %p568 = pneg %p482
        $region34: #{tpu_custom_call.1} parent=11 // pred_check_branch
          %570 = sbr.rel (%p568) target = $region36
        $region35: #{tpu_custom_call.1} parent=11 // pred_region
          _
        $region36: #{tpu_custom_call.1} parent=11 // pred_fallthru
          _
        // Predicated region
        $region37: #{tpu_custom_call.1} parent=11 // pred_check
          %p571 = pneg %p503
        $region38: #{tpu_custom_call.1} parent=11 // pred_check_branch
          %573 = sbr.rel (%p571) target = $region40
        $region39: #{tpu_custom_call.1} parent=11 // pred_region
          _
        $region40: #{tpu_custom_call.1} parent=11 // pred_fallthru
          _
      $region12: #{tpu_custom_call.1} parent=5 // pred_fallthru
        _
      %p574 = scmp.lt.s32.totalorder %s32, 6
      // Predicated region
      $region41: #{tpu_custom_call.1} parent=5 // pred_check
        %p575 = pneg %p574
      $region42: #{tpu_custom_call.1} parent=5 // pred_check_branch
        %577 = sbr.rel (%p575) target = $region44
      $region43: #{tpu_custom_call.1} parent=5 // pred_region
        // Predicated region
        $region45: #{tpu_custom_call.1} parent=43 // pred_check
          %p578 = pneg %p64
        $region46: #{tpu_custom_call.1} parent=43 // pred_check_branch
          %580 = sbr.rel (%p578) target = $region48
        $region47: #{tpu_custom_call.1} parent=43 // pred_region
          %p581 = scmp.lt.s32.totalorder %s39, 1
          %s582 = scalar_select %p581, %s39, 1
          %s583 = smul.addr %s582, 3
          %s584 = smul.addr %s583, 4
          %s585 = scalar_lea.vmem %s0, %s584
        $region48: #{tpu_custom_call.1} parent=43 // pred_fallthru
          _
        // Predicated region
        $region49: #{tpu_custom_call.1} parent=43 // pred_check
          %p586 = pneg %p153
        $region50: #{tpu_custom_call.1} parent=43 // pred_check_branch
          %588 = sbr.rel (%p586) target = $region52
        $region51: #{tpu_custom_call.1} parent=43 // pred_region
          %p589 = scmp.lt.s32.totalorder %s40, 2
          %s590 = scalar_select %p589, %s40, 2
          %s591 = scalar_lea.vmem %s4, %s590
        $region52: #{tpu_custom_call.1} parent=43 // pred_fallthru
          _
        // Predicated region
        $region53: #{tpu_custom_call.1} parent=43 // pred_check
          %p592 = pneg %p179
        $region54: #{tpu_custom_call.1} parent=43 // pred_check_branch
          %594 = sbr.rel (%p592) target = $region56
        $region55: #{tpu_custom_call.1} parent=43 // pred_region
          %p595 = scmp.lt.s32.totalorder %s40, 2
          %s596 = scalar_select %p595, %s40, 2
          %s597 = scalar_lea.vmem %s5, %s596
        $region56: #{tpu_custom_call.1} parent=43 // pred_fallthru
          _
        // Predicated region
        $region57: #{tpu_custom_call.1} parent=43 // pred_check
          %p598 = pneg %p205
        $region58: #{tpu_custom_call.1} parent=43 // pred_check_branch
          %600 = sbr.rel (%p598) target = $region60
        $region59: #{tpu_custom_call.1} parent=43 // pred_region
          %p601 = scmp.lt.s32.totalorder %s40, 2
          %s602 = scalar_select %p601, %s40, 2
          %s603 = smul.addr %s602, 12
          %s604 = smul.addr %s603, 4
          %s605 = scalar_lea.vmem %s6, %s604
        $region60: #{tpu_custom_call.1} parent=43 // pred_fallthru
          _
        // Predicated region
        $region61: #{tpu_custom_call.1} parent=43 // pred_check
          %p606 = pneg %p231
        $region62: #{tpu_custom_call.1} parent=43 // pred_check_branch
          %608 = sbr.rel (%p606) target = $region64
        $region63: #{tpu_custom_call.1} parent=43 // pred_region
          %p609 = scmp.lt.s32.totalorder %s40, 2
          %s610 = scalar_select %p609, %s40, 2
          %s611 = smul.addr %s610, 6
          %s612 = smul.addr %s611, 4
          %s613 = scalar_lea.vmem %s7, %s612
        $region64: #{tpu_custom_call.1} parent=43 // pred_fallthru
          _
        // Predicated region
        $region65: #{tpu_custom_call.1} parent=43 // pred_check
          %p614 = pneg %p257
        $region66: #{tpu_custom_call.1} parent=43 // pred_check_branch
          %616 = sbr.rel (%p614) target = $region68
        $region67: #{tpu_custom_call.1} parent=43 // pred_region
          %p617 = scmp.lt.s32.totalorder %s40, 2
          %s618 = scalar_select %p617, %s40, 2
          %s619 = scalar_lea.vmem %s8, %s618
        $region68: #{tpu_custom_call.1} parent=43 // pred_fallthru
          _
        // Predicated region
        $region69: #{tpu_custom_call.1} parent=43 // pred_check
          %p620 = pneg %p283
        $region70: #{tpu_custom_call.1} parent=43 // pred_check_branch
          %622 = sbr.rel (%p620) target = $region72
        $region71: #{tpu_custom_call.1} parent=43 // pred_region
          %p623 = scmp.lt.s32.totalorder %s40, 2
          %s624 = scalar_select %p623, %s40, 2
          %s625 = scalar_lea.vmem %s9, %s624
        $region72: #{tpu_custom_call.1} parent=43 // pred_fallthru
          _
        // Predicated region
        $region73: #{tpu_custom_call.1} parent=43 // pred_check
          %p626 = pneg %p309
        $region74: #{tpu_custom_call.1} parent=43 // pred_check_branch
          %628 = sbr.rel (%p626) target = $region76
        $region75: #{tpu_custom_call.1} parent=43 // pred_region
          %p629 = scmp.lt.s32.totalorder %s40, 2
          %s630 = scalar_select %p629, %s40, 2
          %s631 = scalar_lea.vmem %s10, %s630
        $region76: #{tpu_custom_call.1} parent=43 // pred_fallthru
          _
        // Predicated region
        $region77: #{tpu_custom_call.1} parent=43 // pred_check
          %p632 = pneg %p335
        $region78: #{tpu_custom_call.1} parent=43 // pred_check_branch
          %634 = sbr.rel (%p632) target = $region80
        $region79: #{tpu_custom_call.1} parent=43 // pred_region
          %s635 = sand.u32 %s325, 1
          %s636 = scalar_lea.sflag [#allocation4], %s635
          %s637 = sand.u32 %s325, 1
          %s638 = smul.addr %s637, 24
          %s639 = scalar_lea.vmem [#allocation3], %s638
          %641 = vsyncadd %s636, 0
          %s642 = smul.addr %s40, 6
          %s643 = smul.addr %s642, 4
          %s644 = scalar_lea.hbm %s11, %s643
          %s645 = sshll.u32 %s644, 4
          %s646 = int_to_ptr.hbm [resolvable:$true] %s645
          %s647 = sshll.u32 %s639, 4
          %s648 = int_to_ptr.vmem [resolvable:$true] %s647
          %653 = dma.hbm_to_vmem [thread:$0]  %s646, 384, %s648, %s636, 64, 64, 4
        $region80: #{tpu_custom_call.1} parent=43 // pred_fallthru
          _
        // Predicated region
        $region81: #{tpu_custom_call.1} parent=43 // pred_check
          %p654 = pneg %p361
        $region82: #{tpu_custom_call.1} parent=43 // pred_check_branch
          %656 = sbr.rel (%p654) target = $region84
        $region83: #{tpu_custom_call.1} parent=43 // pred_region
          %p657 = scmp.lt.s32.totalorder %s40, 2
          %s658 = scalar_select %p657, %s40, 2
          %s659 = scalar_lea.vmem %s12, %s658
        $region84: #{tpu_custom_call.1} parent=43 // pred_fallthru
          _
        // Predicated region
        $region85: #{tpu_custom_call.1} parent=43 // pred_check
          %p660 = pneg %p387
        $region86: #{tpu_custom_call.1} parent=43 // pred_check_branch
          %662 = sbr.rel (%p660) target = $region88
        $region87: #{tpu_custom_call.1} parent=43 // pred_region
          %p663 = scmp.lt.s32.totalorder %s40, 2
          %s664 = scalar_select %p663, %s40, 2
          %s665 = smul.addr %s664, 12
          %s666 = smul.addr %s665, 4
          %s667 = scalar_lea.vmem %s13, %s666
        $region88: #{tpu_custom_call.1} parent=43 // pred_fallthru
          _
        // Predicated region
        $region89: #{tpu_custom_call.1} parent=43 // pred_check
          %p668 = pneg %p413
        $region90: #{tpu_custom_call.1} parent=43 // pred_check_branch
          %670 = sbr.rel (%p668) target = $region92
        $region91: #{tpu_custom_call.1} parent=43 // pred_region
          %p671 = scmp.lt.s32.totalorder %s40, 2
          %s672 = scalar_select %p671, %s40, 2
          %s673 = scalar_lea.vmem %s14, %s672
        $region92: #{tpu_custom_call.1} parent=43 // pred_fallthru
          _
      $region44: #{tpu_custom_call.1} parent=5 // pred_fallthru
        _
      %p674 = scmp.le.s32.totalorder 1, %s32
      %p675 = scmp.lt.s32.totalorder %s32, 7
      %p676 = pnand %p674, %p675
      %p677 = pneg %p676
      // Predicated region
      $region93: #{tpu_custom_call.1} parent=5 // pred_check
        _
      $region94: #{tpu_custom_call.1} parent=5 // pred_check_branch
        %679 = sbr.rel (%p676) target = $region96
      $region95: #{tpu_custom_call.1} parent=5 // pred_region
        %s680 = ssub.s32 %s32, 1
        %s681 = sand.u32 %s328, 1
        %s682 = scalar_lea.sflag [#allocation4], %s681
        %s683 = sand.u32 %s328, 1
        %s684 = smul.addr %s683, 24
        %s685 = scalar_lea.vmem [#allocation3], %s684
        // Predicated region
        $region97: #{tpu_custom_call.1} parent=95 // pred_check
          %p686 = pneg %p341
        $region98: #{tpu_custom_call.1} parent=95 // pred_check_branch
          %688 = sbr.rel (%p686) target = $region100
        $region99: #{tpu_custom_call.1} parent=95 // pred_region
          %690 = dma.done %s682, 384
        $region100: #{tpu_custom_call.1} parent=95 // pred_fallthru
          _
        // Predicated region
        $region101: #{tpu_custom_call.1} parent=95 // pred_check
          %p691 = pneg %p440
        $region102: #{tpu_custom_call.1} parent=95 // pred_check_branch
          %693 = sbr.rel (%p691) target = $region104
        $region103: #{tpu_custom_call.1} parent=95 // pred_region
          %695 = dma.done [#allocation7], 16
        $region104: #{tpu_custom_call.1} parent=95 // pred_fallthru
          _
        %p696 = scmp.lt.s32.totalorder %s41, 1
        %s697 = scalar_select %p696, %s41, 1
        %s698 = smul.addr %s697, 3
        %s699 = smul.addr %s698, 4
        %s700 = scalar_lea.vmem %s0, %s699
        %p701 = pneg %p70
        %p702 = pneg %p67
        %p703 = pneg %p91
        %p704 = pneg %p88
        %p705 = pneg %p112
        %p706 = pneg %p109
        %p707 = pneg %p133
        %p708 = pneg %p130
        %p709 = scmp.lt.s32.totalorder %s42, 2
        %s710 = scalar_select %p709, %s42, 2
        %s711 = scalar_lea.vmem %s4, %s710
        %p712 = pneg %p159
        %p713 = pneg %p156
        %p714 = scmp.lt.s32.totalorder %s42, 2
        %s715 = scalar_select %p714, %s42, 2
        %s716 = scalar_lea.vmem %s5, %s715
        %p717 = pneg %p185
        %p718 = pneg %p182
        %p719 = scmp.lt.s32.totalorder %s42, 2
        %s720 = scalar_select %p719, %s42, 2
        %s721 = smul.addr %s720, 12
        %s722 = smul.addr %s721, 4
        %s723 = scalar_lea.vmem %s6, %s722
        %p724 = pneg %p211
        %p725 = pneg %p208
        %p726 = scmp.lt.s32.totalorder %s42, 2
        %s727 = scalar_select %p726, %s42, 2
        %s728 = smul.addr %s727, 6
        %s729 = smul.addr %s728, 4
        %s730 = scalar_lea.vmem %s7, %s729
        %p731 = pneg %p237
        %p732 = pneg %p234
        %p733 = scmp.lt.s32.totalorder %s42, 2
        %s734 = scalar_select %p733, %s42, 2
        %s735 = scalar_lea.vmem %s8, %s734
        %p736 = pneg %p263
        %p737 = pneg %p260
        %p738 = scmp.lt.s32.totalorder %s42, 2
        %s739 = scalar_select %p738, %s42, 2
        %s740 = scalar_lea.vmem %s9, %s739
        %p741 = pneg %p289
        %p742 = pneg %p286
        %p743 = scmp.lt.s32.totalorder %s42, 2
        %s744 = scalar_select %p743, %s42, 2
        %s745 = scalar_lea.vmem %s10, %s744
        %p746 = pneg %p315
        %p747 = pneg %p312
        %s748 = sand.u32 %s328, 1
        %s749 = scalar_lea.sflag [#allocation4], %s748
        %s750 = sand.u32 %s328, 1
        %s751 = smul.addr %s750, 24
        %s752 = scalar_lea.vmem [#allocation3], %s751
        %p753 = pneg %p341
        %p754 = pneg %p338
        %p755 = scmp.lt.s32.totalorder %s42, 2
        %s756 = scalar_select %p755, %s42, 2
        %s757 = scalar_lea.vmem %s12, %s756
        %p758 = pneg %p367
        %p759 = pneg %p364
        %p760 = scmp.lt.s32.totalorder %s42, 2
        %s761 = scalar_select %p760, %s42, 2
        %s762 = smul.addr %s761, 12
        %s763 = smul.addr %s762, 4
        %s764 = scalar_lea.vmem %s13, %s763
        %p765 = pneg %p393
        %p766 = pneg %p390
        %p767 = scmp.lt.s32.totalorder %s42, 2
        %s768 = scalar_select %p767, %s42, 2
        %s769 = scalar_lea.vmem %s14, %s768
        %p770 = pneg %p419
        %p771 = pneg %p416
        %p772 = pneg %p440
        %p773 = pneg %p437
        %p774 = pneg %p461
        %p775 = pneg %p458
        %p776 = pneg %p482
        %p777 = pneg %p479
        %p778 = pneg %p503
        %p779 = pneg %p500
        %p780 = pneg %p529
        %p781 = pneg %p526
        %s782 = sand.u32 %s516, 1
        %s783 = scalar_lea.sflag [#allocation5], %s782
        %s784 = sand.u32 %s516, 1
        %s785 = scalar_lea.vmem [#allocation8], %s784
        %p786 = scmp.lt.s32.totalorder %s41, 1
        %s787 = scalar_select %p786, %s41, 1
        %s788 = smul.addr %s787, 3
        %s789 = smul.addr %s788, 4
        %s790 = scalar_lea.vmem %s0, %s789
        %p791 = scmp.lt.s32.totalorder %s42, 2
        %s792 = scalar_select %p791, %s42, 2
        %s793 = scalar_lea.vmem %s4, %s792
        %p794 = scmp.lt.s32.totalorder %s42, 2
        %s795 = scalar_select %p794, %s42, 2
        %s796 = scalar_lea.vmem %s5, %s795
        %p797 = scmp.lt.s32.totalorder %s42, 2
        %s798 = scalar_select %p797, %s42, 2
        %s799 = smul.addr %s798, 12
        %s800 = smul.addr %s799, 4
        %s801 = scalar_lea.vmem %s6, %s800
        %p802 = scmp.lt.s32.totalorder %s42, 2
        %s803 = scalar_select %p802, %s42, 2
        %s804 = smul.addr %s803, 6
        %s805 = smul.addr %s804, 4
        %s806 = scalar_lea.vmem %s7, %s805
        %p807 = scmp.lt.s32.totalorder %s42, 2
        %s808 = scalar_select %p807, %s42, 2
        %s809 = scalar_lea.vmem %s8, %s808
        %p810 = scmp.lt.s32.totalorder %s42, 2
        %s811 = scalar_select %p810, %s42, 2
        %s812 = scalar_lea.vmem %s9, %s811
        %p813 = scmp.lt.s32.totalorder %s42, 2
        %s814 = scalar_select %p813, %s42, 2
        %s815 = scalar_lea.vmem %s10, %s814
        %p816 = scmp.lt.s32.totalorder %s42, 2
        %s817 = scalar_select %p816, %s42, 2
        %s818 = scalar_lea.vmem %s12, %s817
        %p819 = scmp.lt.s32.totalorder %s42, 2
        %s820 = scalar_select %p819, %s42, 2
        %s821 = smul.addr %s820, 12
        %s822 = smul.addr %s821, 4
        %s823 = scalar_lea.vmem %s13, %s822
        %p824 = scmp.lt.s32.totalorder %s42, 2
        %s825 = scalar_select %p824, %s42, 2
        %s826 = scalar_lea.vmem %s14, %s825
        %p828 = scmp.eq.s32.totalorder %s42, 0
        // Predicated region
        $region105: #{tpu_custom_call.1} parent=95 // pred_check
          %p829 = pneg %p828
        $region106: #{tpu_custom_call.1} parent=95 // pred_check_branch
          %831 = sbr.rel (%p829) target = $region108
        $region107: #{tpu_custom_call.1} parent=95 // pred_region
          %v832 = vld [vmem:[%s790] sm:$0xf]
          %v833 = vld [vmem:[%s790 + $0x4] sm:$0xf]
          %v834 = vld [vmem:[%s790 + $0x8] sm:$0x1]
          %v835 = vld [vmem:[%s2] sm:$0xf]
          %v836 = vld [vmem:[%s2 + $0x4] sm:$0xf]
          %v837 = vld [vmem:[%s2 + $0x8] sm:$0xf]
          %v838 = vld [vmem:[%s2 + $0xc] sm:$0xf]
          %v839 = vld [vmem:[%s2 + $0x10] sm:$0xf]
          %v840 = vld [vmem:[%s2 + $0x14] sm:$0xf]
          %v841 = vld [vmem:[%s3] sm:$0x1]
          %v843 = vperm.slane %v841, 0
          %v848 = vunpack.c.l.b16 %v832
          %v849 = vunpack.c.l.b16 %v833
          %v850 = vunpack.c.l.b16 %v834
          %v851 = vpack.c.b16 %v849, %v848
          %v852 = vpack.c.b16 %v850, %v850
          %v859 = vunpack.c.l.b16 %v835
          %v860 = vunpack.c.l.b16 %v836
          %v861 = vunpack.c.l.b16 %v837
          %v862 = vunpack.c.l.b16 %v838
          %v863 = vunpack.c.l.b16 %v839
          %v864 = vunpack.c.l.b16 %v840
          %v865 = vpack.c.b16 %v860, %v859
          %v866 = vpack.c.b16 %v862, %v861
          %v867 = vpack.c.b16 %v864, %v863
          %vm871 = vcmask 392192
          %v873 = vsel %vm871, %v851, 0
          %v876 = vsel %vm871, %v852, 0
          %878 = vmatpush.bf16.msra.mxu0 0
          %879 = vmatpush.bf16.msra.mxu0 0
          %880 = vmatpush.bf16.msra.mxu0 0
          %881 = vmatpush.bf16.msra.mxu0 0
          %882 = vmatpush.bf16.msra.mxu0 0
          %883 = vmatpush.bf16.msra.mxu0 %v867
          %884 = vmatpush.bf16.msra.mxu0 %v866
          %885 = vmatpush.bf16.msra.mxu0 %v865
          %886 = vmatmul.bf16.gmra.mxu0 %v873
          %v887 = vpop.f32.mrf.mxu0
          %v888 = vadd.f32 %v843, %v887
          %v889 = vpop.f32.mrf.mxu0
          %v890 = vadd.f32 %v843, %v889
          %891 = vmatmul.bf16.gmra.mxu0 %v876
          %v892 = vpop.f32.mrf.mxu0
          %v893 = vadd.f32 %v843, %v892
          %v894 = vpop.f32.mrf.mxu0
          %895 = vdwg.mxu0
          %v896 = vlaneseq
          %v897 = vshrl.u32 %v896, 7
          %v898 = vadd.s32 %v897, 8
          %v899 = vadd.s32 %v897, 16
          %vm900 = vcmp.eq.s32.totalorder %v897, 0
          %vm901 = vcmp.eq.s32.totalorder %v898, 0
          %vm902 = vcmp.eq.s32.totalorder %v899, 0
          %v903 = vld [vmem:[%s1] sm:$0xff]
          %v904 = vld [vmem:[%s1 + $0x8] sm:$0xff]
          %v905 = vld [vmem:[%s1 + $0x10] sm:$0x1]
          %v906 = vadd.f32 %v888, %v903
          %v907 = vadd.f32 %v890, %v904
          %v908 = vadd.f32 %v893, %v905
          %v909 = vsel %vm900, %v903, %v906
          %v910 = vsel %vm901, %v904, %v907
          %v911 = vsel %vm902, %v905, %v908
          %912 = vst.msk [vmem:[#allocation2] sm:$0xff] %vm871, %v909
          %913 = vst.msk [vmem:[#allocation2 + $0x8] sm:$0xff] %vm871, %v910
          %vm914 = vcmask 385024
          %915 = vst.msk [vmem:[#allocation2 + $0x10] sm:$0x1] %vm914, %v911
        $region108: #{tpu_custom_call.1} parent=95 // pred_fallthru
          _
        %v916 = vld [vmem:[#allocation2] sm:$0xff]
        %v917 = vld [vmem:[#allocation2 + $0x8] sm:$0xff]
        %v918 = vld [vmem:[#allocation2 + $0x10] sm:$0x1]
        %v919 = vld [vmem:[%s793] sm:$0x1]
        %v920 = vld [vmem:[%s796] sm:$0x1]
        %vm921 = vcmask 392192
        %v922 = vsel %vm921, %v916, 0.0
        %923 = vadd.xlane.f32.xlu0 %v922
        %v924 = vpop.xlane.xlu0 %923
        %v925 = vsel %vm921, %v917, 0.0
        %926 = vadd.xlane.f32.xlu0 %v925
        %v927 = vpop.xlane.xlu0 %926
        %vm928 = vcmask 385024
        %v929 = vsel %vm928, %v918, 0.0
        %930 = vadd.xlane.f32.xlu0 %v929
        %v931 = vpop.xlane.xlu0 %930
        %v932 = vrcp.pop 48.0
        %v933 = vmul.f32 48.0, %v932
        %v934 = vsub.f32 1.0, %v933
        %v935 = vmul.f32 %v932, %v934
        %v936 = vadd.f32 %v932, %v935
        %vm937 = vweird.f32 %v932
        %v938 = vsel %vm937, %v932, %v936
        %v939 = vmul.f32 %v924, %v938
        %v940 = vmul.f32 %v927, %v938
        %v941 = vmul.f32 %v931, %v938
        %v942 = vsub.f32 %v916, %v939
        %v943 = vsub.f32 %v917, %v940
        %v944 = vsub.f32 %v918, %v941
        %v945 = vmul.f32 %v942, %v942
        %v946 = vmul.f32 %v943, %v943
        %v947 = vmul.f32 %v944, %v944
        %v948 = vsel %vm921, %v945, 0.0
        %949 = vadd.xlane.f32.xlu0 %v948
        %v950 = vpop.xlane.xlu0 %949
        %v951 = vsel %vm921, %v946, 0.0
        %952 = vadd.xlane.f32.xlu0 %v951
        %v953 = vpop.xlane.xlu0 %952
        %v954 = vsel %vm928, %v947, 0.0
        %955 = vadd.xlane.f32.xlu0 %v954
        %v956 = vpop.xlane.xlu0 %955
        %v957 = vmul.f32 %v950, %v938
        %v958 = vmul.f32 %v953, %v938
        %v959 = vmul.f32 %v956, %v938
        %v960 = vadd.f32 %v957, 1e-05
        %v961 = vadd.f32 %v958, 1e-05
        %v962 = vadd.f32 %v959, 1e-05
        %v963 = vrsqrt.pop %v960
        %v964 = vmul.f32 %v963, %v960
        %v965 = vmul.f32 %v964, %v963
        %v966 = vmul.f32 0.5, %v965
        %v967 = vsub.f32 1.5, %v966
        %v968 = vmul.f32 %v963, %v967
        %vm969 = vweird.f32 %v960
        %vm970 = vweird.f32 %v963
        %vm971 = vmor %vm969, %vm970
        %v972 = vsel %vm971, %v963, %v968
        %v973 = vrsqrt.pop %v961
        %v974 = vmul.f32 %v973, %v961
        %v975 = vmul.f32 %v974, %v973
        %v976 = vmul.f32 0.5, %v975
        %v977 = vsub.f32 1.5, %v976
        %v978 = vmul.f32 %v973, %v977
        %vm979 = vweird.f32 %v961
        %vm980 = vweird.f32 %v973
        %vm981 = vmor %vm979, %vm980
        %v982 = vsel %vm981, %v973, %v978
        %v983 = vrsqrt.pop %v962
        %v984 = vmul.f32 %v983, %v962
        %v985 = vmul.f32 %v984, %v983
        %v986 = vmul.f32 0.5, %v985
        %v987 = vsub.f32 1.5, %v986
        %v988 = vmul.f32 %v983, %v987
        %vm989 = vweird.f32 %v962
        %vm990 = vweird.f32 %v983
        %vm991 = vmor %vm989, %vm990
        %v992 = vsel %vm991, %v983, %v988
        %v993 = vmul.f32 %v942, %v972
        %v994 = vmul.f32 %v943, %v982
        %v995 = vmul.f32 %v944, %v992
        %v997 = vperm.slane %v919, 0
        %v999 = vmul.f32 %v993, %v997
        %v1000 = vmul.f32 %v994, %v997
        %v1001 = vmul.f32 %v995, %v997
        %v1003 = vperm.slane %v920, 0
        %v1005 = vadd.f32 %v999, %v1003
        %v1006 = vadd.f32 %v1000, %v1003
        %v1007 = vadd.f32 %v1001, %v1003
        %v1008 = vpack.c.bf16 %v1006, %v1005
        %v1009 = vpack.c.bf16 %v1007, %v1007
        %v1010 = vld [vmem:[%s801] sm:$0xff]
        %v1011 = vld [vmem:[%s801 + $0x8] sm:$0xff]
        %v1012 = vld [vmem:[%s801 + $0x10] sm:$0xff]
        %v1013 = vld [vmem:[%s801 + $0x18] sm:$0xff]
        %v1014 = vld [vmem:[%s801 + $0x20] sm:$0xff]
        %v1015 = vld [vmem:[%s801 + $0x28] sm:$0xff]
        %v1022 = vunpack.c.l.b16 %v1010
        %v1023 = vunpack.c.h.b16 %v1010
        %v1024 = vunpack.c.l.b16 %v1011
        %v1025 = vunpack.c.h.b16 %v1011
        %v1026 = vunpack.c.l.b16 %v1012
        %v1027 = vunpack.c.h.b16 %v1012
        %v1028 = vunpack.c.l.b16 %v1013
        %v1029 = vunpack.c.h.b16 %v1013
        %v1030 = vunpack.c.l.b16 %v1014
        %v1031 = vunpack.c.h.b16 %v1014
        %v1032 = vunpack.c.l.b16 %v1015
        %v1033 = vunpack.c.h.b16 %v1015
        %v1034 = vpack.c.b16 %v1024, %v1022
        %v1035 = vpack.c.b16 %v1025, %v1023
        %v1036 = vpack.c.b16 %v1028, %v1026
        %v1037 = vpack.c.b16 %v1029, %v1027
        %v1038 = vpack.c.b16 %v1032, %v1030
        %v1039 = vpack.c.b16 %v1033, %v1031
        %v1047 = vsel %vm921, %v1008, 0
        %v1050 = vsel %vm921, %v1009, 0
        %1052 = vmatpush.bf16.msra.mxu0 0
        %1053 = vmatpush.bf16.msra.mxu0 0
        %1054 = vmatpush.bf16.msra.mxu0 0
        %1055 = vmatpush.bf16.msra.mxu0 0
        %1056 = vmatpush.bf16.msra.mxu0 0
        %1057 = vmatpush.bf16.msra.mxu0 %v1038
        %1058 = vmatpush.bf16.msra.mxu0 %v1036
        %1059 = vmatpush.bf16.msra.mxu0 %v1034
        %1060 = vmatmul.bf16.gmra.mxu0 %v1047
        %v1061 = vpop.f32.mrf.mxu0
        %v1062 = vadd.f32 0.0, %v1061
        %v1063 = vpop.f32.mrf.mxu0
        %v1064 = vadd.f32 0.0, %v1063
        %1065 = vmatmul.bf16.gmra.mxu0 %v1050
        %v1066 = vpop.f32.mrf.mxu0
        %v1067 = vadd.f32 0.0, %v1066
        %v1068 = vpop.f32.mrf.mxu0
        %1069 = vdwg.mxu0
        %1070 = vmatpush.bf16.msra.mxu0 0
        %1071 = vmatpush.bf16.msra.mxu0 0
        %1072 = vmatpush.bf16.msra.mxu0 0
        %1073 = vmatpush.bf16.msra.mxu0 0
        %1074 = vmatpush.bf16.msra.mxu0 0
        %1075 = vmatpush.bf16.msra.mxu0 %v1039
        %1076 = vmatpush.bf16.msra.mxu0 %v1037
        %1077 = vmatpush.bf16.msra.mxu0 %v1035
        %1078 = vmatmul.bf16.gmra.mxu0 %v1047
        %v1079 = vpop.f32.mrf.mxu0
        %v1080 = vadd.f32 0.0, %v1079
        %v1081 = vpop.f32.mrf.mxu0
        %v1082 = vadd.f32 0.0, %v1081
        %1083 = vmatmul.bf16.gmra.mxu0 %v1050
        %v1084 = vpop.f32.mrf.mxu0
        %v1085 = vadd.f32 0.0, %v1084
        %v1086 = vpop.f32.mrf.mxu0
        %1087 = vdwg.mxu0
        %v1088 = vpack.c.bf16 %v1064, %v1062
        %v1089 = vpack.c.bf16 %v1067, %v1067
        %1092 = vrot.lane.b32.xlu0 %v1088, 80
        %v1093 = vpop.permute.xlu0 %1092
        %1094 = vrot.lane.b32.xlu0 %v1089, 80
        %v1095 = vpop.permute.xlu0 %1094
        %vm1096 = vcmask 97280
        %v1098 = vsel %vm1096, %v1088, 0
        %v1101 = vsel %vm1096, %v1089, 0
        %v1104 = vsel %vm1096, %v1093, 0
        %v1107 = vsel %vm1096, %v1095, 0
        %1109 = vmatpush.bf16.xpose.msra.mxu0 0
        %1110 = vmatpush.bf16.xpose.msra.mxu0 0
        %1111 = vmatpush.bf16.xpose.msra.mxu0 0
        %1112 = vmatpush.bf16.xpose.msra.mxu0 0
        %1113 = vmatpush.bf16.xpose.msra.mxu0 0
        %1114 = vmatpush.bf16.xpose.msra.mxu0 0
        %1115 = vmatpush.bf16.xpose.msra.mxu0 %v1107
        %1116 = vmatpush.bf16.xpose.msra.mxu0 %v1104
        %1117 = vmatmul.bf16.gmra.mxu0 %v1098
        %v1118 = vpop.f32.mrf.mxu0
        %v1119 = vadd.f32 0.0, %v1118
        %v1120 = vpop.f32.mrf.mxu0
        %v1121 = vadd.f32 0.0, %v1120
        %1122 = vmatmul.bf16.gmra.mxu0 %v1101
        %v1123 = vpop.f32.mrf.mxu0
        %v1124 = vadd.f32 0.0, %v1123
        %v1125 = vpop.f32.mrf.mxu0
        %1126 = vdwg.mxu0
        %v1127 = vmul.f32 %v1119, 0.28867513
        %v1128 = vmul.f32 %v1121, 0.28867513
        %v1129 = vmul.f32 %v1124, 0.28867513
        %vm1130 = vcmask 138240
        %v1131 = vsel %vm1130, %v1127, -inf
        %1132 = vmax.xlane.f32.xlu0 %v1131
        %v1133 = vpop.xlane.xlu0 %1132
        %v1134 = vsel %vm1130, %v1128, -inf
        %1135 = vmax.xlane.f32.xlu0 %v1134
        %v1136 = vpop.xlane.xlu0 %1135
        %vm1137 = vcmask 131072
        %v1138 = vsel %vm1137, %v1129, -inf
        %1139 = vmax.xlane.f32.xlu0 %v1138
        %v1140 = vpop.xlane.xlu0 %1139
        %v1141 = vsub.f32 %v1127, %v1133
        %v1142 = vsub.f32 %v1128, %v1136
        %v1143 = vsub.f32 %v1129, %v1140
        %v1144 = vmul.f32 %v1141, 1.442695
        %v1145 = vpow.pop %v1144
        %v1146 = vmul.f32 %v1142, 1.442695
        %v1147 = vpow.pop %v1146
        %v1148 = vmul.f32 %v1143, 1.442695
        %v1149 = vpow.pop %v1148
        %v1150 = vsel %vm1130, %v1145, 0.0
        %1151 = vadd.xlane.f32.xlu0 %v1150
        %v1152 = vpop.xlane.xlu0 %1151
        %v1153 = vsel %vm1130, %v1147, 0.0
        %1154 = vadd.xlane.f32.xlu0 %v1153
        %v1155 = vpop.xlane.xlu0 %1154
        %v1156 = vsel %vm1137, %v1149, 0.0
        %1157 = vadd.xlane.f32.xlu0 %v1156
        %v1158 = vpop.xlane.xlu0 %1157
        %v1159 = vrcp.pop %v1152
        %v1160 = vrcp.pop %v1155
        %v1161 = vrcp.pop %v1158
        %v1162 = vmul.f32 %v1145, %v1159
        %v1163 = vmul.f32 %v1147, %v1160
        %v1164 = vmul.f32 %v1149, %v1161
        %v1165 = vpack.c.bf16 %v1163, %v1162
        %v1166 = vpack.c.bf16 %v1164, %v1164
        %1167 = vrot.lane.b32.xlu0 %v1088, 32
        %v1168 = vpop.permute.xlu0 %1167
        %1169 = vrot.lane.b32.xlu0 %v1089, 32
        %v1170 = vpop.permute.xlu0 %1169
        %v1173 = vsel %vm1130, %v1165, 0
        %v1176 = vsel %vm1130, %v1166, 0
        %vm1178 = vcmask 1040384
        %v1179 = vsel 0, 4294967295, 65535
        %v1180 = vsel %vm1178, %v1179, 0
        %v1182 = vand.u32 %v1170, %v1180
        %1184 = vmatpush.bf16.msra.mxu0 0
        %1185 = vmatpush.bf16.msra.mxu0 0
        %1186 = vmatpush.bf16.msra.mxu0 0
        %1187 = vmatpush.bf16.msra.mxu0 0
        %1188 = vmatpush.bf16.msra.mxu0 0
        %1189 = vmatpush.bf16.msra.mxu0 0
        %1190 = vmatpush.bf16.msra.mxu0 %v1182
        %1191 = vmatpush.bf16.msra.mxu0 %v1168
        %1192 = vmatmul.bf16.gmra.mxu0 %v1173
        %v1193 = vpop.f32.mrf.mxu0
        %v1194 = vadd.f32 0.0, %v1193
        %v1195 = vpop.f32.mrf.mxu0
        %v1196 = vadd.f32 0.0, %v1195
        %1197 = vmatmul.bf16.gmra.mxu0 %v1176
        %v1198 = vpop.f32.mrf.mxu0
        %v1199 = vadd.f32 0.0, %v1198
        %v1200 = vpop.f32.mrf.mxu0
        %1201 = vdwg.mxu0
        %1202 = vrot.lane.b32.xlu0 %v1088, 116
        %v1203 = vpop.permute.xlu0 %1202
        %1204 = vrot.lane.b32.xlu0 %v1089, 116
        %v1205 = vpop.permute.xlu0 %1204
        %1206 = vrot.lane.b32.xlu0 %v1088, 68
        %v1207 = vpop.permute.xlu0 %1206
        %1208 = vrot.lane.b32.xlu0 %v1089, 68
        %v1209 = vpop.permute.xlu0 %1208
        %v1211 = vsel %vm1096, %v1203, 0
        %v1214 = vsel %vm1096, %v1205, 0
        %v1217 = vsel %vm1096, %v1207, 0
        %v1220 = vsel %vm1096, %v1209, 0
        %1222 = vmatpush.bf16.xpose.msra.mxu0 0
        %1223 = vmatpush.bf16.xpose.msra.mxu0 0
        %1224 = vmatpush.bf16.xpose.msra.mxu0 0
        %1225 = vmatpush.bf16.xpose.msra.mxu0 0
        %1226 = vmatpush.bf16.xpose.msra.mxu0 0
        %1227 = vmatpush.bf16.xpose.msra.mxu0 0
        %1228 = vmatpush.bf16.xpose.msra.mxu0 %v1220
        %1229 = vmatpush.bf16.xpose.msra.mxu0 %v1217
        %1230 = vmatmul.bf16.gmra.mxu0 %v1211
        %v1231 = vpop.f32.mrf.mxu0
        %v1232 = vadd.f32 0.0, %v1231
        %v1233 = vpop.f32.mrf.mxu0
        %v1234 = vadd.f32 0.0, %v1233
        %1235 = vmatmul.bf16.gmra.mxu0 %v1214
        %v1236 = vpop.f32.mrf.mxu0
        %v1237 = vadd.f32 0.0, %v1236
        %v1238 = vpop.f32.mrf.mxu0
        %1239 = vdwg.mxu0
        %v1240 = vmul.f32 %v1232, 0.28867513
        %v1241 = vmul.f32 %v1234, 0.28867513
        %v1242 = vmul.f32 %v1237, 0.28867513
        %v1243 = vsel %vm1130, %v1240, -inf
        %1244 = vmax.xlane.f32.xlu0 %v1243
        %v1245 = vpop.xlane.xlu0 %1244
        %v1246 = vsel %vm1130, %v1241, -inf
        %1247 = vmax.xlane.f32.xlu0 %v1246
        %v1248 = vpop.xlane.xlu0 %1247
        %v1249 = vsel %vm1137, %v1242, -inf
        %1250 = vmax.xlane.f32.xlu0 %v1249
        %v1251 = vpop.xlane.xlu0 %1250
        %v1252 = vsub.f32 %v1240, %v1245
        %v1253 = vsub.f32 %v1241, %v1248
        %v1254 = vsub.f32 %v1242, %v1251
        %v1255 = vmul.f32 %v1252, 1.442695
        %v1256 = vpow.pop %v1255
        %v1257 = vmul.f32 %v1253, 1.442695
        %v1258 = vpow.pop %v1257
        %v1259 = vmul.f32 %v1254, 1.442695
        %v1260 = vpow.pop %v1259
        %v1261 = vsel %vm1130, %v1256, 0.0
        %1262 = vadd.xlane.f32.xlu0 %v1261
        %v1263 = vpop.xlane.xlu0 %1262
        %v1264 = vsel %vm1130, %v1258, 0.0
        %1265 = vadd.xlane.f32.xlu0 %v1264
        %v1266 = vpop.xlane.xlu0 %1265
        %v1267 = vsel %vm1137, %v1260, 0.0
        %1268 = vadd.xlane.f32.xlu0 %v1267
        %v1269 = vpop.xlane.xlu0 %1268
        %v1270 = vrcp.pop %v1263
        %v1271 = vrcp.pop %v1266
        %v1272 = vrcp.pop %v1269
        %v1273 = vmul.f32 %v1256, %v1270
        %v1274 = vmul.f32 %v1258, %v1271
        %v1275 = vmul.f32 %v1260, %v1272
        %v1276 = vpack.c.bf16 %v1274, %v1273
        %v1277 = vpack.c.bf16 %v1275, %v1275
        %1278 = vrot.lane.b32.xlu0 %v1088, 20
        %v1279 = vpop.permute.xlu0 %1278
        %1280 = vrot.lane.b32.xlu0 %v1089, 20
        %v1281 = vpop.permute.xlu0 %1280
        %v1284 = vsel %vm1130, %v1276, 0
        %v1287 = vsel %vm1130, %v1277, 0
        %v1290 = vand.u32 %v1281, %v1180
        %1292 = vmatpush.bf16.msra.mxu0 0
        %1293 = vmatpush.bf16.msra.mxu0 0
        %1294 = vmatpush.bf16.msra.mxu0 0
        %1295 = vmatpush.bf16.msra.mxu0 0
        %1296 = vmatpush.bf16.msra.mxu0 0
        %1297 = vmatpush.bf16.msra.mxu0 0
        %1298 = vmatpush.bf16.msra.mxu0 %v1290
        %1299 = vmatpush.bf16.msra.mxu0 %v1279
        %1300 = vmatmul.bf16.gmra.mxu0 %v1284
        %v1301 = vpop.f32.mrf.mxu0
        %v1302 = vadd.f32 0.0, %v1301
        %v1303 = vpop.f32.mrf.mxu0
        %v1304 = vadd.f32 0.0, %v1303
        %1305 = vmatmul.bf16.gmra.mxu0 %v1287
        %v1306 = vpop.f32.mrf.mxu0
        %v1307 = vadd.f32 0.0, %v1306
        %v1308 = vpop.f32.mrf.mxu0
        %1309 = vdwg.mxu0
        %v1310 = vpack.c.bf16 %v1082, %v1080
        %v1311 = vpack.c.bf16 %v1085, %v1085
        %1312 = vrot.lane.b32.xlu0 %v1088, 104
        %v1313 = vpop.permute.xlu0 %1312
        %1314 = vrot.lane.b32.xlu0 %v1089, 104
        %v1315 = vpop.permute.xlu0 %1314
        %1316 = vrot.lane.b32.xlu0 %v1088, 56
        %v1317 = vpop.permute.xlu0 %1316
        %1318 = vrot.lane.b32.xlu0 %v1089, 56
        %v1319 = vpop.permute.xlu0 %1318
        %v1321 = vsel %vm1096, %v1313, 0
        %v1324 = vsel %vm1096, %v1315, 0
        %v1327 = vsel %vm1096, %v1317, 0
        %v1330 = vsel %vm1096, %v1319, 0
        %1332 = vmatpush.bf16.xpose.msra.mxu0 0
        %1333 = vmatpush.bf16.xpose.msra.mxu0 0
        %1334 = vmatpush.bf16.xpose.msra.mxu0 0
        %1335 = vmatpush.bf16.xpose.msra.mxu0 0
        %1336 = vmatpush.bf16.xpose.msra.mxu0 0
        %1337 = vmatpush.bf16.xpose.msra.mxu0 0
        %1338 = vmatpush.bf16.xpose.msra.mxu0 %v1330
        %1339 = vmatpush.bf16.xpose.msra.mxu0 %v1327
        %1340 = vmatmul.bf16.gmra.mxu0 %v1321
        %v1341 = vpop.f32.mrf.mxu0
        %v1342 = vadd.f32 0.0, %v1341
        %v1343 = vpop.f32.mrf.mxu0
        %v1344 = vadd.f32 0.0, %v1343
        %1345 = vmatmul.bf16.gmra.mxu0 %v1324
        %v1346 = vpop.f32.mrf.mxu0
        %v1347 = vadd.f32 0.0, %v1346
        %v1348 = vpop.f32.mrf.mxu0
        %1349 = vdwg.mxu0
        %v1350 = vmul.f32 %v1342, 0.28867513
        %v1351 = vmul.f32 %v1344, 0.28867513
        %v1352 = vmul.f32 %v1347, 0.28867513
        %v1353 = vsel %vm1130, %v1350, -inf
        %1354 = vmax.xlane.f32.xlu0 %v1353
        %v1355 = vpop.xlane.xlu0 %1354
        %v1356 = vsel %vm1130, %v1351, -inf
        %1357 = vmax.xlane.f32.xlu0 %v1356
        %v1358 = vpop.xlane.xlu0 %1357
        %v1359 = vsel %vm1137, %v1352, -inf
        %1360 = vmax.xlane.f32.xlu0 %v1359
        %v1361 = vpop.xlane.xlu0 %1360
        %v1362 = vsub.f32 %v1350, %v1355
        %v1363 = vsub.f32 %v1351, %v1358
        %v1364 = vsub.f32 %v1352, %v1361
        %v1365 = vmul.f32 %v1362, 1.442695
        %v1366 = vpow.pop %v1365
        %v1367 = vmul.f32 %v1363, 1.442695
        %v1368 = vpow.pop %v1367
        %v1369 = vmul.f32 %v1364, 1.442695
        %v1370 = vpow.pop %v1369
        %v1371 = vsel %vm1130, %v1366, 0.0
        %1372 = vadd.xlane.f32.xlu0 %v1371
        %v1373 = vpop.xlane.xlu0 %1372
        %v1374 = vsel %vm1130, %v1368, 0.0
        %1375 = vadd.xlane.f32.xlu0 %v1374
        %v1376 = vpop.xlane.xlu0 %1375
        %v1377 = vsel %vm1137, %v1370, 0.0
        %1378 = vadd.xlane.f32.xlu0 %v1377
        %v1379 = vpop.xlane.xlu0 %1378
        %v1380 = vrcp.pop %v1373
        %v1381 = vrcp.pop %v1376
        %v1382 = vrcp.pop %v1379
        %v1383 = vmul.f32 %v1366, %v1380
        %v1384 = vmul.f32 %v1368, %v1381
        %v1385 = vmul.f32 %v1370, %v1382
        %v1386 = vpack.c.bf16 %v1384, %v1383
        %v1387 = vpack.c.bf16 %v1385, %v1385
        %1390 = vrot.lane.b32.xlu0 %v1088, 8
        %v1391 = vpop.permute.xlu0 %1390
        %1392 = vrot.lane.b32.xlu0 %v1310, 8
        %v1393 = vpop.permute.xlu0 %1392
        %1394 = vrot.lane.b32.xlu0 %v1089, 8
        %v1395 = vpop.permute.xlu0 %1394
        %1396 = vrot.lane.b32.xlu0 %v1311, 8
        %v1397 = vpop.permute.xlu0 %1396
        %vm1398 = vcmask 64512
        %v1399 = vsel %vm1398, %v1391, %v1393
        %v1400 = vsel %vm1398, %v1395, %v1397
        %v1403 = vsel %vm1130, %v1386, 0
        %v1406 = vsel %vm1130, %v1387, 0
        %v1409 = vand.u32 %v1400, %v1180
        %1411 = vmatpush.bf16.msra.mxu0 0
        %1412 = vmatpush.bf16.msra.mxu0 0
        %1413 = vmatpush.bf16.msra.mxu0 0
        %1414 = vmatpush.bf16.msra.mxu0 0
        %1415 = vmatpush.bf16.msra.mxu0 0
        %1416 = vmatpush.bf16.msra.mxu0 0
        %1417 = vmatpush.bf16.msra.mxu0 %v1409
        %1418 = vmatpush.bf16.msra.mxu0 %v1399
        %1419 = vmatmul.bf16.gmra.mxu0 %v1403
        %v1420 = vpop.f32.mrf.mxu0
        %v1421 = vadd.f32 0.0, %v1420
        %v1422 = vpop.f32.mrf.mxu0
        %v1423 = vadd.f32 0.0, %v1422
        %1424 = vmatmul.bf16.gmra.mxu0 %v1406
        %v1425 = vpop.f32.mrf.mxu0
        %v1426 = vadd.f32 0.0, %v1425
        %v1427 = vpop.f32.mrf.mxu0
        %1428 = vdwg.mxu0
        %1429 = vrot.lane.b32.xlu0 %v1088, 92
        %v1430 = vpop.permute.xlu0 %1429
        %1431 = vrot.lane.b32.xlu0 %v1089, 92
        %v1432 = vpop.permute.xlu0 %1431
        %1433 = vrot.lane.b32.xlu0 %v1088, 44
        %v1434 = vpop.permute.xlu0 %1433
        %1435 = vrot.lane.b32.xlu0 %v1089, 44
        %v1436 = vpop.permute.xlu0 %1435
        %v1438 = vsel %vm1096, %v1430, 0
        %v1441 = vsel %vm1096, %v1432, 0
        %v1444 = vsel %vm1096, %v1434, 0
        %v1447 = vsel %vm1096, %v1436, 0
        %1449 = vmatpush.bf16.xpose.msra.mxu0 0
        %1450 = vmatpush.bf16.xpose.msra.mxu0 0
        %1451 = vmatpush.bf16.xpose.msra.mxu0 0
        %1452 = vmatpush.bf16.xpose.msra.mxu0 0
        %1453 = vmatpush.bf16.xpose.msra.mxu0 0
        %1454 = vmatpush.bf16.xpose.msra.mxu0 0
        %1455 = vmatpush.bf16.xpose.msra.mxu0 %v1447
        %1456 = vmatpush.bf16.xpose.msra.mxu0 %v1444
        %1457 = vmatmul.bf16.gmra.mxu0 %v1438
        %v1458 = vpop.f32.mrf.mxu0
        %v1459 = vadd.f32 0.0, %v1458
        %v1460 = vpop.f32.mrf.mxu0
        %v1461 = vadd.f32 0.0, %v1460
        %1462 = vmatmul.bf16.gmra.mxu0 %v1441
        %v1463 = vpop.f32.mrf.mxu0
        %v1464 = vadd.f32 0.0, %v1463
        %v1465 = vpop.f32.mrf.mxu0
        %1466 = vdwg.mxu0
        %v1467 = vmul.f32 %v1459, 0.28867513
        %v1468 = vmul.f32 %v1461, 0.28867513
        %v1469 = vmul.f32 %v1464, 0.28867513
        %v1470 = vsel %vm1130, %v1467, -inf
        %1471 = vmax.xlane.f32.xlu0 %v1470
        %v1472 = vpop.xlane.xlu0 %1471
        %v1473 = vsel %vm1130, %v1468, -inf
        %1474 = vmax.xlane.f32.xlu0 %v1473
        %v1475 = vpop.xlane.xlu0 %1474
        %v1476 = vsel %vm1137, %v1469, -inf
        %1477 = vmax.xlane.f32.xlu0 %v1476
        %v1478 = vpop.xlane.xlu0 %1477
        %v1479 = vsub.f32 %v1467, %v1472
        %v1480 = vsub.f32 %v1468, %v1475
        %v1481 = vsub.f32 %v1469, %v1478
        %v1482 = vmul.f32 %v1479, 1.442695
        %v1483 = vpow.pop %v1482
        %v1484 = vmul.f32 %v1480, 1.442695
        %v1485 = vpow.pop %v1484
        %v1486 = vmul.f32 %v1481, 1.442695
        %v1487 = vpow.pop %v1486
        %v1488 = vsel %vm1130, %v1483, 0.0
        %1489 = vadd.xlane.f32.xlu0 %v1488
        %v1490 = vpop.xlane.xlu0 %1489
        %v1491 = vsel %vm1130, %v1485, 0.0
        %1492 = vadd.xlane.f32.xlu0 %v1491
        %v1493 = vpop.xlane.xlu0 %1492
        %v1494 = vsel %vm1137, %v1487, 0.0
        %1495 = vadd.xlane.f32.xlu0 %v1494
        %v1496 = vpop.xlane.xlu0 %1495
        %v1497 = vrcp.pop %v1490
        %v1498 = vrcp.pop %v1493
        %v1499 = vrcp.pop %v1496
        %v1500 = vmul.f32 %v1483, %v1497
        %v1501 = vmul.f32 %v1485, %v1498
        %v1502 = vmul.f32 %v1487, %v1499
        %v1503 = vpack.c.bf16 %v1501, %v1500
        %v1504 = vpack.c.bf16 %v1502, %v1502
        %1505 = vrot.lane.b32.xlu0 %v1310, 124
        %v1506 = vpop.permute.xlu0 %1505
        %1507 = vrot.lane.b32.xlu0 %v1311, 124
        %v1508 = vpop.permute.xlu0 %1507
        %v1511 = vsel %vm1130, %v1503, 0
        %v1514 = vsel %vm1130, %v1504, 0
        %v1517 = vand.u32 %v1508, %v1180
        %1519 = vmatpush.bf16.msra.mxu0 0
        %1520 = vmatpush.bf16.msra.mxu0 0
        %1521 = vmatpush.bf16.msra.mxu0 0
        %1522 = vmatpush.bf16.msra.mxu0 0
        %1523 = vmatpush.bf16.msra.mxu0 0
        %1524 = vmatpush.bf16.msra.mxu0 0
        %1525 = vmatpush.bf16.msra.mxu0 %v1517
        %1526 = vmatpush.bf16.msra.mxu0 %v1506
        %1527 = vmatmul.bf16.gmra.mxu0 %v1511
        %v1528 = vpop.f32.mrf.mxu0
        %v1529 = vadd.f32 0.0, %v1528
        %v1530 = vpop.f32.mrf.mxu0
        %v1531 = vadd.f32 0.0, %v1530
        %1532 = vmatmul.bf16.gmra.mxu0 %v1514
        %v1533 = vpop.f32.mrf.mxu0
        %v1534 = vadd.f32 0.0, %v1533
        %v1535 = vpop.f32.mrf.mxu0
        %1536 = vdwg.mxu0
        %1540 = vrot.lane.b32.xlu0 %v1302, 12
        %v1541 = vpop.permute.xlu0 %1540
        %1542 = vrot.lane.b32.xlu0 %v1304, 12
        %v1543 = vpop.permute.xlu0 %1542
        %1544 = vrot.lane.b32.xlu0 %v1307, 12
        %v1545 = vpop.permute.xlu0 %1544
        %1552 = vrot.lane.b32.xlu0 %v1421, 24
        %v1553 = vpop.permute.xlu0 %1552
        %1554 = vrot.lane.b32.xlu0 %v1423, 24
        %v1555 = vpop.permute.xlu0 %1554
        %1556 = vrot.lane.b32.xlu0 %v1426, 24
        %v1557 = vpop.permute.xlu0 %1556
        %1564 = vrot.lane.b32.xlu0 %v1529, 36
        %v1565 = vpop.permute.xlu0 %1564
        %1566 = vrot.lane.b32.xlu0 %v1531, 36
        %v1567 = vpop.permute.xlu0 %1566
        %1568 = vrot.lane.b32.xlu0 %v1534, 36
        %v1569 = vpop.permute.xlu0 %1568
        %v1573 = vsel %vm1096, %v1194, %v1541
        %v1574 = vsel %vm1096, %v1196, %v1543
        %v1575 = vsel %vm1096, %v1199, %v1545
        %vm1576 = vcmask 195584
        %v1577 = vsel %vm1576, %v1573, %v1553
        %v1578 = vsel %vm1576, %v1574, %v1555
        %v1579 = vsel %vm1576, %v1575, %v1557
        %vm1580 = vcmask 293888
        %v1581 = vsel %vm1580, %v1577, %v1565
        %v1582 = vsel %vm1580, %v1578, %v1567
        %v1583 = vsel %vm1580, %v1579, %v1569
        %v1584 = vpack.c.bf16 %v1582, %v1581
        %v1585 = vpack.c.bf16 %v1583, %v1583
        %v1586 = vld [vmem:[%s806] sm:$0xf]
        %v1587 = vld [vmem:[%s806 + $0x4] sm:$0xf]
        %v1588 = vld [vmem:[%s806 + $0x8] sm:$0xf]
        %v1589 = vld [vmem:[%s806 + $0xc] sm:$0xf]
        %v1590 = vld [vmem:[%s806 + $0x10] sm:$0xf]
        %v1591 = vld [vmem:[%s806 + $0x14] sm:$0xf]
        %v1592 = vld [vmem:[%s809] sm:$0x1]
        %v1594 = vperm.slane %v1592, 0
        %v1602 = vunpack.c.l.b16 %v1586
        %v1603 = vunpack.c.l.b16 %v1587
        %v1604 = vunpack.c.l.b16 %v1588
        %v1605 = vunpack.c.l.b16 %v1589
        %v1606 = vunpack.c.l.b16 %v1590
        %v1607 = vunpack.c.l.b16 %v1591
        %v1608 = vpack.c.b16 %v1603, %v1602
        %v1609 = vpack.c.b16 %v1605, %v1604
        %v1610 = vpack.c.b16 %v1607, %v1606
        %v1615 = vsel %vm921, %v1584, 0
        %v1618 = vsel %vm921, %v1585, 0
        %1620 = vmatpush.bf16.msra.mxu0 0
        %1621 = vmatpush.bf16.msra.mxu0 0
        %1622 = vmatpush.bf16.msra.mxu0 0
        %1623 = vmatpush.bf16.msra.mxu0 0
        %1624 = vmatpush.bf16.msra.mxu0 0
        %1625 = vmatpush.bf16.msra.mxu0 %v1610
        %1626 = vmatpush.bf16.msra.mxu0 %v1609
        %1627 = vmatpush.bf16.msra.mxu0 %v1608
        %1628 = vmatmul.bf16.gmra.mxu0 %v1615
        %v1629 = vpop.f32.mrf.mxu0
        %v1630 = vadd.f32 %v1594, %v1629
        %v1631 = vpop.f32.mrf.mxu0
        %v1632 = vadd.f32 %v1594, %v1631
        %1633 = vmatmul.bf16.gmra.mxu0 %v1618
        %v1634 = vpop.f32.mrf.mxu0
        %v1635 = vadd.f32 %v1594, %v1634
        %v1636 = vpop.f32.mrf.mxu0
        %1637 = vdwg.mxu0
        %v1638 = vadd.f32 %v916, %v1630
        %v1639 = vadd.f32 %v917, %v1632
        %v1640 = vadd.f32 %v918, %v1635
        %v1641 = vld [vmem:[%s812] sm:$0x1]
        %v1642 = vld [vmem:[%s815] sm:$0x1]
        %v1643 = vsel %vm921, %v1638, 0.0
        %1644 = vadd.xlane.f32.xlu0 %v1643
        %v1645 = vpop.xlane.xlu0 %1644
        %v1646 = vsel %vm921, %v1639, 0.0
        %1647 = vadd.xlane.f32.xlu0 %v1646
        %v1648 = vpop.xlane.xlu0 %1647
        %v1649 = vsel %vm928, %v1640, 0.0
        %1650 = vadd.xlane.f32.xlu0 %v1649
        %v1651 = vpop.xlane.xlu0 %1650
        %v1652 = vmul.f32 %v1645, %v938
        %v1653 = vmul.f32 %v1648, %v938
        %v1654 = vmul.f32 %v1651, %v938
        %v1655 = vsub.f32 %v1638, %v1652
        %v1656 = vsub.f32 %v1639, %v1653
        %v1657 = vsub.f32 %v1640, %v1654
        %v1658 = vmul.f32 %v1655, %v1655
        %v1659 = vmul.f32 %v1656, %v1656
        %v1660 = vmul.f32 %v1657, %v1657
        %v1661 = vsel %vm921, %v1658, 0.0
        %1662 = vadd.xlane.f32.xlu0 %v1661
        %v1663 = vpop.xlane.xlu0 %1662
        %v1664 = vsel %vm921, %v1659, 0.0
        %1665 = vadd.xlane.f32.xlu0 %v1664
        %v1666 = vpop.xlane.xlu0 %1665
        %v1667 = vsel %vm928, %v1660, 0.0
        %1668 = vadd.xlane.f32.xlu0 %v1667
        %v1669 = vpop.xlane.xlu0 %1668
        %v1670 = vmul.f32 %v1663, %v938
        %v1671 = vmul.f32 %v1666, %v938
        %v1672 = vmul.f32 %v1669, %v938
        %v1673 = vadd.f32 %v1670, 1e-05
        %v1674 = vadd.f32 %v1671, 1e-05
        %v1675 = vadd.f32 %v1672, 1e-05
        %v1676 = vrsqrt.pop %v1673
        %v1677 = vmul.f32 %v1676, %v1673
        %v1678 = vmul.f32 %v1677, %v1676
        %v1679 = vmul.f32 0.5, %v1678
        %v1680 = vsub.f32 1.5, %v1679
        %v1681 = vmul.f32 %v1676, %v1680
        %vm1682 = vweird.f32 %v1673
        %vm1683 = vweird.f32 %v1676
        %vm1684 = vmor %vm1682, %vm1683
        %v1685 = vsel %vm1684, %v1676, %v1681
        %v1686 = vrsqrt.pop %v1674
        %v1687 = vmul.f32 %v1686, %v1674
        %v1688 = vmul.f32 %v1687, %v1686
        %v1689 = vmul.f32 0.5, %v1688
        %v1690 = vsub.f32 1.5, %v1689
        %v1691 = vmul.f32 %v1686, %v1690
        %vm1692 = vweird.f32 %v1674
        %vm1693 = vweird.f32 %v1686
        %vm1694 = vmor %vm1692, %vm1693
        %v1695 = vsel %vm1694, %v1686, %v1691
        %v1696 = vrsqrt.pop %v1675
        %v1697 = vmul.f32 %v1696, %v1675
        %v1698 = vmul.f32 %v1697, %v1696
        %v1699 = vmul.f32 0.5, %v1698
        %v1700 = vsub.f32 1.5, %v1699
        %v1701 = vmul.f32 %v1696, %v1700
        %vm1702 = vweird.f32 %v1675
        %vm1703 = vweird.f32 %v1696
        %vm1704 = vmor %vm1702, %vm1703
        %v1705 = vsel %vm1704, %v1696, %v1701
        %v1706 = vmul.f32 %v1655, %v1685
        %v1707 = vmul.f32 %v1656, %v1695
        %v1708 = vmul.f32 %v1657, %v1705
        %v1710 = vperm.slane %v1641, 0
        %v1712 = vmul.f32 %v1706, %v1710
        %v1713 = vmul.f32 %v1707, %v1710
        %v1714 = vmul.f32 %v1708, %v1710
        %v1716 = vperm.slane %v1642, 0
        %v1718 = vadd.f32 %v1712, %v1716
        %v1719 = vadd.f32 %v1713, %v1716
        %v1720 = vadd.f32 %v1714, %v1716
        %v1721 = vpack.c.bf16 %v1719, %v1718
        %v1722 = vpack.c.bf16 %v1720, %v1720
        %v1723 = vld [vmem:[%s685] sm:$0xf]
        %v1724 = vld [vmem:[%s685 + $0x4] sm:$0xf]
        %v1725 = vld [vmem:[%s685 + $0x8] sm:$0xf]
        %v1726 = vld [vmem:[%s685 + $0xc] sm:$0xf]
        %v1727 = vld [vmem:[%s685 + $0x10] sm:$0xf]
        %v1728 = vld [vmem:[%s685 + $0x14] sm:$0xf]
        %v1729 = vld [vmem:[%s818] sm:$0x1]
        %v1731 = vperm.slane %v1729, 0
        %v1739 = vunpack.c.l.b16 %v1723
        %v1740 = vunpack.c.l.b16 %v1724
        %v1741 = vunpack.c.l.b16 %v1725
        %v1742 = vunpack.c.l.b16 %v1726
        %v1743 = vunpack.c.l.b16 %v1727
        %v1744 = vunpack.c.l.b16 %v1728
        %v1745 = vpack.c.b16 %v1740, %v1739
        %v1746 = vpack.c.b16 %v1742, %v1741
        %v1747 = vpack.c.b16 %v1744, %v1743
        %v1752 = vsel %vm921, %v1721, 0
        %v1755 = vsel %vm921, %v1722, 0
        %1757 = vmatpush.bf16.msra.mxu0 0
        %1758 = vmatpush.bf16.msra.mxu0 0
        %1759 = vmatpush.bf16.msra.mxu0 0
        %1760 = vmatpush.bf16.msra.mxu0 0
        %1761 = vmatpush.bf16.msra.mxu0 0
        %1762 = vmatpush.bf16.msra.mxu0 %v1747
        %1763 = vmatpush.bf16.msra.mxu0 %v1746
        %1764 = vmatpush.bf16.msra.mxu0 %v1745
        %1765 = vmatmul.bf16.gmra.mxu0 %v1752
        %v1766 = vpop.f32.mrf.mxu0
        %v1767 = vadd.f32 %v1731, %v1766
        %v1768 = vpop.f32.mrf.mxu0
        %v1769 = vadd.f32 %v1731, %v1768
        %1770 = vmatmul.bf16.gmra.mxu0 %v1755
        %v1771 = vpop.f32.mrf.mxu0
        %v1772 = vadd.f32 %v1731, %v1771
        %v1773 = vpop.f32.mrf.mxu0
        %1774 = vdwg.mxu0
        %v1775 = vmul.f32 %v1767, 0.5
        %v1776 = vmul.f32 %v1769, 0.5
        %v1777 = vmul.f32 %v1772, 0.5
        %v1778 = vmul.f32 %v1767, 0.70710677
        %v1779 = vmul.f32 %v1769, 0.70710677
        %v1780 = vmul.f32 %v1772, 0.70710677
        %v1781 = vmul.f32 %v1778, %v1778
        %v1782 = vmin.f32 16.0, %v1781
        %v1783 = vmul.f32 %v1782, 2.1237322e-06
        %v1784 = vadd.f32 %v1783, 0.00028619796
        %v1785 = vmul.f32 %v1782, %v1784
        %v1786 = vadd.f32 %v1785, 0.0036580483
        %v1787 = vmul.f32 %v1782, %v1786
        %v1788 = vadd.f32 %v1787, 0.05243302
        %v1789 = vmul.f32 %v1782, %v1788
        %v1790 = vadd.f32 %v1789, 0.18741608
        %v1791 = vmul.f32 %v1782, %v1790
        %v1792 = vadd.f32 %v1791, 1.1283791
        %v1793 = vmul.f32 %v1778, %v1792
        %v1794 = vmul.f32 %v1782, 3.8918573e-05
        %v1795 = vadd.f32 %v1794, 0.001143296
        %v1796 = vmul.f32 %v1782, %v1795
        %v1797 = vadd.f32 %v1796, 0.014752088
        %v1798 = vmul.f32 %v1782, %v1797
        %v1799 = vadd.f32 %v1798, 0.112945676
        %v1800 = vmul.f32 %v1782, %v1799
        %v1801 = vadd.f32 %v1800, 0.4994258
        %v1802 = vmul.f32 %v1782, %v1801
        %v1803 = vadd.f32 %v1802, 1.0
        %v1804 = vrcp.pop %v1803
        %v1805 = vmul.f32 %v1803, %v1804
        %v1806 = vsub.f32 1.0, %v1805
        %v1807 = vmul.f32 %v1804, %v1806
        %v1808 = vadd.f32 %v1804, %v1807
        %vm1809 = vweird.f32 %v1803
        %vm1810 = vweird.f32 %v1804
        %vm1811 = vmor %vm1809, %vm1810
        %v1812 = vsel %vm1811, %v1804, %v1808
        %v1813 = vand.u32 2147483647, %v1803
        %vm1814 = vcmp.eq.f32.partialorder %v1813, 8.507059e+37
        %v1815 = vand.u32 %v1803, 2147483648
        %v1816 = vor.u32 1.1754944e-38, %v1815
        %v1817 = vsel %vm1814, %v1816, %v1812
        %v1818 = vmul.f32 %v1793, %v1817
        %v1819 = vmin.f32 %v1818, 1.0
        %v1820 = vmax.f32 %v1819, -1.0
        %v1821 = vmul.f32 %v1779, %v1779
        %v1822 = vmin.f32 16.0, %v1821
        %v1823 = vmul.f32 %v1822, 2.1237322e-06
        %v1824 = vadd.f32 %v1823, 0.00028619796
        %v1825 = vmul.f32 %v1822, %v1824
        %v1826 = vadd.f32 %v1825, 0.0036580483
        %v1827 = vmul.f32 %v1822, %v1826
        %v1828 = vadd.f32 %v1827, 0.05243302
        %v1829 = vmul.f32 %v1822, %v1828
        %v1830 = vadd.f32 %v1829, 0.18741608
        %v1831 = vmul.f32 %v1822, %v1830
        %v1832 = vadd.f32 %v1831, 1.1283791
        %v1833 = vmul.f32 %v1779, %v1832
        %v1834 = vmul.f32 %v1822, 3.8918573e-05
        %v1835 = vadd.f32 %v1834, 0.001143296
        %v1836 = vmul.f32 %v1822, %v1835
        %v1837 = vadd.f32 %v1836, 0.014752088
        %v1838 = vmul.f32 %v1822, %v1837
        %v1839 = vadd.f32 %v1838, 0.112945676
        %v1840 = vmul.f32 %v1822, %v1839
        %v1841 = vadd.f32 %v1840, 0.4994258
        %v1842 = vmul.f32 %v1822, %v1841
        %v1843 = vadd.f32 %v1842, 1.0
        %v1844 = vrcp.pop %v1843
        %v1845 = vmul.f32 %v1843, %v1844
        %v1846 = vsub.f32 1.0, %v1845
        %v1847 = vmul.f32 %v1844, %v1846
        %v1848 = vadd.f32 %v1844, %v1847
        %vm1849 = vweird.f32 %v1843
        %vm1850 = vweird.f32 %v1844
        %vm1851 = vmor %vm1849, %vm1850
        %v1852 = vsel %vm1851, %v1844, %v1848
        %v1853 = vand.u32 2147483647, %v1843
        %vm1854 = vcmp.eq.f32.partialorder %v1853, 8.507059e+37
        %v1855 = vand.u32 %v1843, 2147483648
        %v1856 = vor.u32 1.1754944e-38, %v1855
        %v1857 = vsel %vm1854, %v1856, %v1852
        %v1858 = vmul.f32 %v1833, %v1857
        %v1859 = vmin.f32 %v1858, 1.0
        %v1860 = vmax.f32 %v1859, -1.0
        %v1861 = vmul.f32 %v1780, %v1780
        %v1862 = vmin.f32 16.0, %v1861
        %v1863 = vmul.f32 %v1862, 2.1237322e-06
        %v1864 = vadd.f32 %v1863, 0.00028619796
        %v1865 = vmul.f32 %v1862, %v1864
        %v1866 = vadd.f32 %v1865, 0.0036580483
        %v1867 = vmul.f32 %v1862, %v1866
        %v1868 = vadd.f32 %v1867, 0.05243302
        %v1869 = vmul.f32 %v1862, %v1868
        %v1870 = vadd.f32 %v1869, 0.18741608
        %v1871 = vmul.f32 %v1862, %v1870
        %v1872 = vadd.f32 %v1871, 1.1283791
        %v1873 = vmul.f32 %v1780, %v1872
        %v1874 = vmul.f32 %v1862, 3.8918573e-05
        %v1875 = vadd.f32 %v1874, 0.001143296
        %v1876 = vmul.f32 %v1862, %v1875
        %v1877 = vadd.f32 %v1876, 0.014752088
        %v1878 = vmul.f32 %v1862, %v1877
        %v1879 = vadd.f32 %v1878, 0.112945676
        %v1880 = vmul.f32 %v1862, %v1879
        %v1881 = vadd.f32 %v1880, 0.4994258
        %v1882 = vmul.f32 %v1862, %v1881
        %v1883 = vadd.f32 %v1882, 1.0
        %v1884 = vrcp.pop %v1883
        %v1885 = vmul.f32 %v1883, %v1884
        %v1886 = vsub.f32 1.0, %v1885
        %v1887 = vmul.f32 %v1884, %v1886
        %v1888 = vadd.f32 %v1884, %v1887
        %vm1889 = vweird.f32 %v1883
        %vm1890 = vweird.f32 %v1884
        %vm1891 = vmor %vm1889, %vm1890
        %v1892 = vsel %vm1891, %v1884, %v1888
        %v1893 = vand.u32 2147483647, %v1883
        %vm1894 = vcmp.eq.f32.partialorder %v1893, 8.507059e+37
        %v1895 = vand.u32 %v1883, 2147483648
        %v1896 = vor.u32 1.1754944e-38, %v1895
        %v1897 = vsel %vm1894, %v1896, %v1892
        %v1898 = vmul.f32 %v1873, %v1897
        %v1899 = vmin.f32 %v1898, 1.0
        %v1900 = vmax.f32 %v1899, -1.0
        %v1901 = vadd.f32 %v1820, 1.0
        %v1902 = vadd.f32 %v1860, 1.0
        %v1903 = vadd.f32 %v1900, 1.0
        %v1904 = vmul.f32 %v1775, %v1901
        %v1905 = vmul.f32 %v1776, %v1902
        %v1906 = vmul.f32 %v1777, %v1903
        %v1907 = vpack.c.bf16 %v1905, %v1904
        %v1908 = vpack.c.bf16 %v1906, %v1906
        %v1909 = vld [vmem:[%s823] sm:$0xf]
        %v1910 = vld [vmem:[%s823 + $0x4] sm:$0xf]
        %v1911 = vld [vmem:[%s823 + $0x8] sm:$0xf]
        %v1912 = vld [vmem:[%s823 + $0xc] sm:$0xf]
        %v1913 = vld [vmem:[%s823 + $0x10] sm:$0xf]
        %v1914 = vld [vmem:[%s823 + $0x14] sm:$0xf]
        %v1915 = vld [vmem:[%s823 + $0x18] sm:$0xf]
        %v1916 = vld [vmem:[%s823 + $0x1c] sm:$0xf]
        %v1917 = vld [vmem:[%s823 + $0x20] sm:$0xf]
        %v1918 = vld [vmem:[%s823 + $0x24] sm:$0xf]
        %v1919 = vld [vmem:[%s823 + $0x28] sm:$0xf]
        %v1920 = vld [vmem:[%s823 + $0x2c] sm:$0xf]
        %v1921 = vld [vmem:[%s826] sm:$0x1]
        %v1923 = vperm.slane %v1921, 0
        %v1937 = vunpack.c.l.b16 %v1909
        %v1938 = vunpack.c.l.b16 %v1910
        %v1939 = vunpack.c.l.b16 %v1911
        %v1940 = vunpack.c.l.b16 %v1912
        %v1941 = vunpack.c.l.b16 %v1913
        %v1942 = vunpack.c.l.b16 %v1914
        %v1943 = vunpack.c.l.b16 %v1915
        %v1944 = vunpack.c.l.b16 %v1916
        %v1945 = vunpack.c.l.b16 %v1917
        %v1946 = vunpack.c.l.b16 %v1918
        %v1947 = vunpack.c.l.b16 %v1919
        %v1948 = vunpack.c.l.b16 %v1920
        %v1949 = vpack.c.b16 %v1938, %v1937
        %v1950 = vpack.c.b16 %v1940, %v1939
        %v1951 = vpack.c.b16 %v1942, %v1941
        %v1952 = vpack.c.b16 %v1944, %v1943
        %v1953 = vpack.c.b16 %v1946, %v1945
        %v1954 = vpack.c.b16 %v1948, %v1947
        %vm1961 = vcmask 785408
        %v1963 = vsel %vm1961, %v1907, 0
        %v1966 = vsel %vm1961, %v1908, 0
        %1968 = vmatpush.bf16.msra.mxu0 0
        %1969 = vmatpush.bf16.msra.mxu0 0
        %1970 = vmatpush.bf16.msra.mxu0 %v1954
        %1971 = vmatpush.bf16.msra.mxu0 %v1953
        %1972 = vmatpush.bf16.msra.mxu0 %v1952
        %1973 = vmatpush.bf16.msra.mxu0 %v1951
        %1974 = vmatpush.bf16.msra.mxu0 %v1950
        %1975 = vmatpush.bf16.msra.mxu0 %v1949
        %1976 = vmatmul.bf16.gmra.mxu0 %v1963
        %v1977 = vpop.f32.mrf.mxu0
        %v1978 = vadd.f32 %v1923, %v1977
        %v1979 = vpop.f32.mrf.mxu0
        %v1980 = vadd.f32 %v1923, %v1979
        %1981 = vmatmul.bf16.gmra.mxu0 %v1966
        %v1982 = vpop.f32.mrf.mxu0
        %v1983 = vadd.f32 %v1923, %v1982
        %v1984 = vpop.f32.mrf.mxu0
        %1985 = vdwg.mxu0
        %v1986 = vadd.f32 %v1638, %v1978
        %v1987 = vadd.f32 %v1639, %v1980
        %v1988 = vadd.f32 %v1640, %v1983
        %1989 = vst.msk [vmem:[#allocation2] sm:$0xff] %vm921, %v1986
        %1990 = vst.msk [vmem:[#allocation2 + $0x8] sm:$0xff] %vm921, %v1987
        %1991 = vst.msk [vmem:[#allocation2 + $0x10] sm:$0x1] %vm928, %v1988
        %p1992 = scmp.eq.s32.totalorder %s42, 2
        // Predicated region
        $region109: #{tpu_custom_call.1} parent=95 // pred_check
          %p1993 = pneg %p1992
        $region110: #{tpu_custom_call.1} parent=95 // pred_check_branch
          %1995 = sbr.rel (%p1993) target = $region112
        $region111: #{tpu_custom_call.1} parent=95 // pred_region
          %v1996 = vld [vmem:[#allocation6] sm:$0x1]
          %v1997 = vld [vmem:[%s16] sm:$0x1]
          %v1998 = vsel %vm928, %v1986, 0.0
          %1999 = vadd.xlane.f32.xlu0 %v1998
          %v2000 = vpop.xlane.xlu0 %1999
          %v2001 = vmul.f32 %v2000, %v938
          %v2002 = vsub.f32 %v1986, %v2001
          %v2003 = vmul.f32 %v2002, %v2002
          %v2004 = vsel %vm928, %v2003, 0.0
          %2005 = vadd.xlane.f32.xlu0 %v2004
          %v2006 = vpop.xlane.xlu0 %2005
          %v2007 = vmul.f32 %v2006, %v938
          %v2008 = vadd.f32 %v2007, 1e-05
          %v2009 = vrsqrt.pop %v2008
          %v2010 = vmul.f32 %v2009, %v2008
          %v2011 = vmul.f32 %v2010, %v2009
          %v2012 = vmul.f32 0.5, %v2011
          %v2013 = vsub.f32 1.5, %v2012
          %v2014 = vmul.f32 %v2009, %v2013
          %vm2015 = vweird.f32 %v2008
          %vm2016 = vweird.f32 %v2009
          %vm2017 = vmor %vm2015, %vm2016
          %v2018 = vsel %vm2017, %v2009, %v2014
          %v2019 = vmul.f32 %v2002, %v2018
          %v2020 = vmul.f32 %v2019, %v1996
          %v2021 = vadd.f32 %v2020, %v1997
          %v2022 = vpack.c.bf16 %v2021, %v2021
          %v2023 = vld [vmem:[%s17] sm:$0xf]
          %v2024 = vld [vmem:[%s17 + $0x4] sm:$0xf]
          %v2025 = vld [vmem:[%s17 + $0x8] sm:$0xf]
          %v2026 = vld [vmem:[%s17 + $0xc] sm:$0xf]
          %v2027 = vld [vmem:[%s17 + $0x10] sm:$0xf]
          %v2028 = vld [vmem:[%s17 + $0x14] sm:$0xf]
          %v2029 = vld [vmem:[%s18] sm:$0x1]
          %v2036 = vunpack.c.l.b16 %v2023
          %v2037 = vunpack.c.l.b16 %v2024
          %v2038 = vunpack.c.l.b16 %v2025
          %v2039 = vunpack.c.l.b16 %v2026
          %v2040 = vunpack.c.l.b16 %v2027
          %v2041 = vunpack.c.l.b16 %v2028
          %v2042 = vpack.c.b16 %v2037, %v2036
          %v2043 = vpack.c.b16 %v2039, %v2038
          %v2044 = vpack.c.b16 %v2041, %v2040
          %v2049 = vsel %vm921, %v2022, 0
          %2051 = vmatpush.bf16.msra.mxu0 0
          %2052 = vmatpush.bf16.msra.mxu0 0
          %2053 = vmatpush.bf16.msra.mxu0 0
          %2054 = vmatpush.bf16.msra.mxu0 0
          %2055 = vmatpush.bf16.msra.mxu0 0
          %2056 = vmatpush.bf16.msra.mxu0 %v2044
          %2057 = vmatpush.bf16.msra.mxu0 %v2043
          %2058 = vmatpush.bf16.msra.mxu0 %v2042
          %2059 = vmatmul.bf16.gmra.mxu0 %v2049
          %v2060 = vpop.f32.mrf.mxu0
          %v2061 = vadd.f32 %v2029, %v2060
          %v2062 = vpop.f32.mrf.mxu0
          %2063 = vdwg.mxu0
          %vm2064 = vcmask 73728
          %2065 = vst.msk [vmem:[%s785] sm:$0x1] %vm2064, %v2061
        $region112: #{tpu_custom_call.1} parent=95 // pred_fallthru
          _
        %s2066 = sand.u32 %s516, 1
        %s2067 = scalar_lea.sflag [#allocation5], %s2066
        %s2068 = sand.u32 %s516, 1
        %s2069 = scalar_lea.vmem [#allocation8], %s2068
        // Predicated region
        $region113: #{tpu_custom_call.1} parent=95 // pred_check
          %p2070 = pneg %p526
        $region114: #{tpu_custom_call.1} parent=95 // pred_check_branch
          %2072 = sbr.rel (%p2070) target = $region116
        $region115: #{tpu_custom_call.1} parent=95 // pred_region
          %2074 = vsyncadd %s2067, 0
          %s2075 = scalar_lea.hbm %s19, %s41
          %s2077 = sshll.u32 %s2069, 4
          %s2078 = int_to_ptr.vmem [resolvable:$true] %s2077
          %s2079 = sshll.u32 %s2075, 4
          %s2080 = int_to_ptr.hbm [resolvable:$true] %s2079
          %2082 = dma.vmem_to_hbm [thread:$0]  %s2078, 16, %s2080, %s2067
        $region116: #{tpu_custom_call.1} parent=95 // pred_fallthru
          _
      $region96: #{tpu_custom_call.1} parent=5 // pred_fallthru
        _
      %p2083 = scmp.le.s32.totalorder 2, %s32
      // Predicated region
      $region117: #{tpu_custom_call.1} parent=5 // pred_check
        %p2084 = pneg %p2083
      $region118: #{tpu_custom_call.1} parent=5 // pred_check_branch
        %2086 = sbr.rel (%p2084) target = $region120
      $region119: #{tpu_custom_call.1} parent=5 // pred_region
        %s2087 = ssub.s32 %s32, 2
        // Predicated region
        $region121: #{tpu_custom_call.1} parent=119 // pred_check
          %p2088 = pneg %p532
        $region122: #{tpu_custom_call.1} parent=119 // pred_check_branch
          %2090 = sbr.rel (%p2088) target = $region124
        $region123: #{tpu_custom_call.1} parent=119 // pred_region
          %s2091 = sand.u32 %s517, 1
          %s2092 = scalar_lea.sflag [#allocation5], %s2091
          %s2093 = sand.u32 %s517, 1
          %s2094 = scalar_lea.vmem [#allocation8], %s2093
          %2096 = dma.done %s2092, 16
        $region124: #{tpu_custom_call.1} parent=119 // pred_fallthru
          _
      $region120: #{tpu_custom_call.1} parent=5 // pred_fallthru
        _
    $region6: #{tpu_custom_call.1} parent=1 // loop_footer
      %s36 = sadd.s32 1, %s32
    $region7: #{tpu_custom_call.1} parent=1 // loop_footer_branch
      %31 = sbr.rel target = $region3
    $region8: #{tpu_custom_call.1} parent=1 // loop_exit
      _
    %2097 = vsyncpa [#allocation4], 1
    %s2098 = scalar_lea.sflag [#allocation4], 1
    %2099 = vsyncpa %s2098, 1
    %2100 = vsyncpa [#allocation7], 1
    %2101 = vsyncpa [#allocation5], 1
    %s2102 = scalar_lea.sflag [#allocation5], 1
    %2103 = vsyncpa %s2102, 1

</llo_original>
